<compile_context>
chip_gen: v5e
topology: v5e:2x2
jax: 0.10.0
libtpu: 0.0.40
codegen_flags: <defaults>
</compile_context>

<pallas_src>
import functools

import jax
import jax.numpy as jnp
from jax.experimental import pallas as pl
from jax.experimental.pallas import tpu as pltpu


def _round_up(x, m):
    return (x + m - 1) // m * m


# ---------------------------------------------------------------------------
# Fused kernel: 4 main matmuls + per-layer BatchNorm (+ LeakyReLU), VMEM-resident.
# ---------------------------------------------------------------------------
def _truncated_cnn_kernel(x_ref, wrow_ref, wcol_ref, wfc_ref, bn_ref, o_ref, *,
                          L, L1, C1, F1, L2, C2, F2, H, NL,
                          r_p1t, r_p2t, c_p1, r_p2, r_wf2, eps, neg_slope):
    f32, bf16 = jnp.float32, jnp.bfloat16
    B = x_ref.shape[0]

    # --- static slices of the packed parameter blocks (aligned starts) -------
    t1 = wrow_ref[0:L, :]                                    # (L,  F1) bf16  conv1 Toeplitz
    p1t = wrow_ref[r_p1t:r_p1t + C1, :].astype(f32)          # (C1, F1) broadcast-back
    p2t = wrow_ref[r_p2t:r_p2t + C2, 0:F2].astype(f32)       # (C2, F2)
    t2 = wcol_ref[0:F1, 0:F2]                                # (F1, F2) bf16  conv2 Toeplitz
    p1 = wcol_ref[0:F1, c_p1:c_p1 + C1].astype(f32)          # (F1, C1) channel pool
    p2 = wcol_ref[r_p2:r_p2 + F2, 0:C2].astype(f32)          # (F2, C2)
    wf1 = wfc_ref[0:F2, 0:H]                                 # (F2, H)  bf16
    wf2 = wfc_ref[r_wf2:r_wf2 + H, 0:NL]                     # (H,  NL) bf16

    def leaky(v):
        return jnp.where(v >= 0.0, v, neg_slope * v)         # LeakyReLU(0.01)

    def bn_grouped(y, p, pt, gamma, beta, n):
        # BatchNorm1d with batch statistics per channel over (batch, length),
        # on a (B, channel*length) channel-major layout.  The channel pooling
        # and the broadcast-back are tiny 0/1 matmuls on the MXU; all stats f32.
        inv_n = 1.0 / n
        s = jnp.sum(y, axis=0, keepdims=True)                        # (1, F)
        mean_c = jnp.dot(s, p, preferred_element_type=f32) * inv_n   # (1, C)
        mean_f = jnp.dot(mean_c, pt, preferred_element_type=f32)     # (1, F)
        d = y - mean_f
        ss = jnp.sum(d * d, axis=0, keepdims=True)                   # (1, F)
        var_c = jnp.dot(ss, p, preferred_element_type=f32) * inv_n   # (1, C)
        scale_f = jnp.dot(jax.lax.rsqrt(var_c + eps), pt,
                          preferred_element_type=f32)                # (1, F)
        return d * (gamma * scale_f) + beta

    def bn_rows(y, gamma, beta):
        # Plain per-feature BatchNorm over the batch rows (fc layers).
        mean = jnp.mean(y, axis=0, keepdims=True)
        d = y - mean
        var = jnp.mean(d * d, axis=0, keepdims=True)
        return d * (gamma * jax.lax.rsqrt(var + eps)) + beta

    x = x_ref[...].astype(bf16)                                      # (B, L)

    # ---- conv1 (block-Toeplitz matmul) + BN + LeakyReLU ---------------------
    a1 = jnp.dot(x, t1, preferred_element_type=f32)                  # (B, F1)
    y1 = leaky(bn_grouped(a1, p1, p1t,
                          bn_ref[0:1, 0:F1], bn_ref[1:2, 0:F1], B * L1))

    # ---- conv2 (block-Toeplitz matmul) + BN + LeakyReLU ---------------------
    a2 = jnp.dot(y1.astype(bf16), t2, preferred_element_type=f32)    # (B, F2)
    y2 = leaky(bn_grouped(a2, p2, p2t,
                          bn_ref[2:3, 0:F2], bn_ref[3:4, 0:F2], B * L2))

    # ---- flatten (feature order already (c2, l2)) + fc1 + BN + LeakyReLU ----
    h1 = jnp.dot(y2.astype(bf16), wf1, preferred_element_type=f32)   # (B, H)
    h1 = leaky(bn_rows(h1, bn_ref[4:5, 0:H], bn_ref[5:6, 0:H]))

    # ---- Dropout = identity at inference; fc2 + BN (no activation) ----------
    h2 = jnp.dot(h1.astype(bf16), wf2, preferred_element_type=f32)   # (B, NL)
    h2 = bn_rows(h2, bn_ref[6:7, 0:NL], bn_ref[7:8, 0:NL])

    o_ref[...] = h2.astype(o_ref.dtype)


# ---------------------------------------------------------------------------
# Wrapper: one pallas_call for the full forward pass.
# ---------------------------------------------------------------------------
def truncated_cnn_forward(x, params, *, cfg, eps=1e-5, neg_slope=0.01):
    """x: (B, 1, nbeats) float32, NCL layout as in the PyTorch module."""
    B = x.shape[0]
    x2d = x[:, 0, :].astype(jnp.float32)        # Cin == 1: drop channel axis

    kern = functools.partial(_truncated_cnn_kernel,
                             eps=eps, neg_slope=neg_slope, **cfg)
    operands = (x2d, params["w_row"], params["w_col"], params["w_fc"], params["bn"])
    return pl.pallas_call(
        kern,
        out_shape=jax.ShapeDtypeStruct((B, cfg["NL"]), jnp.float32),
        grid=(1,),
        in_specs=[pl.BlockSpec(a.shape, lambda i: (0, 0)) for a in operands],
        out_specs=pl.BlockSpec((B, cfg["NL"]), lambda i: (0, 0)),
        compiler_params=pltpu.CompilerParams(
            dimension_semantics=("arbitrary",)),
    )(*operands)


# ---------------------------------------------------------------------------
# Deterministic parameter construction (all static one-hot / Toeplitz folding
# happens HERE, once, on the host; kernel sees only packed dense operands).
# ---------------------------------------------------------------------------
def make_params(key, *, num_labels, nbeats,
                num_chann=(20, 10), ker_size=(10, 10), stride=(2, 2),
                num_hidden=60):
    if num_labels == 2:
        num_labels = 1
    C1, C2 = num_chann
    K1, K2 = ker_size
    s1, s2 = stride
    H = num_hidden
    L = nbeats
    L1 = (L - K1) // s1 + 1
    L2 = (L1 - K2) // s2 + 1
    F1, F2 = C1 * L1, C2 * L2
    NL = num_labels
    assert F2 <= F1, "packing assumes the feature dim shrinks layer to layer"
    assert NL <= H, "packing assumes num_labels <= hidden width"

    ks = jax.random.split(key, 4)
    # PyTorch-native weights.  Conv/Linear biases are omitted: a per-channel
    # constant before a batch-statistics BatchNorm is cancelled exactly.
    w1_pt = 0.1 * jax.random.normal(ks[0], (C1, 1, K1), jnp.float32)       # Conv1d(1, C1)
    w2_pt = 0.1 * jax.random.normal(ks[1], (C2, C1, K2), jnp.float32)      # Conv1d(C1, C2)
    wf1_pt = 0.1 * jax.random.normal(ks[2], (H, F2), jnp.float32)          # Linear(C2*L2, H)
    wf2_pt = 0.1 * jax.random.normal(ks[3], (NL, H), jnp.float32)          # Linear(H, NL)

    # ---- conv1 as block-Toeplitz: a1[b, c1*L1+l1] = sum_j x[b, j] * T1[j, f]
    f1 = jnp.arange(F1)
    c1_of, l1_of = f1 // L1, f1 % L1
    jj = jnp.arange(L)[:, None]
    k1 = jj - s1 * l1_of[None, :]
    T1 = jnp.where((k1 >= 0) & (k1 < K1),
                   w1_pt[c1_of[None, :], 0, jnp.clip(k1, 0, K1 - 1)], 0.0)   # (L, F1)

    # ---- conv2 as block-Toeplitz on the (c1, l1) feature layout
    ci, li = f1 // L1, f1 % L1
    f2 = jnp.arange(F2)
    co, lo = f2 // L2, f2 % L2
    k2 = li[:, None] - s2 * lo[None, :]
    T2 = jnp.where((k2 >= 0) & (k2 < K2),
                   w2_pt[co[None, :], ci[:, None], jnp.clip(k2, 0, K2 - 1)], 0.0)  # (F1, F2)

    # ---- 0/1 per-channel pooling matrices for the conv BatchNorm statistics
    P1 = (c1_of[:, None] == jnp.arange(C1)[None, :]).astype(jnp.float32)     # (F1, C1)
    P2 = (co[:, None] == jnp.arange(C2)[None, :]).astype(jnp.float32)        # (F2, C2)

    # ---- packed operand 1: "row" block (wide matrices), bf16 ---------------
    r_p1t = _round_up(L, 8)
    r_p2t = _round_up(r_p1t + C1, 8)
    w_row = jnp.zeros((r_p2t + C2, F1), jnp.float32)
    w_row = w_row.at[0:L, :].set(T1)
    w_row = w_row.at[r_p1t:r_p1t + C1, :].set(P1.T)
    w_row = w_row.at[r_p2t:r_p2t + C2, 0:F2].set(P2.T)
    w_row = w_row.astype(jnp.bfloat16)

    # ---- packed operand 2: "column" block (tall matrices), bf16 -------------
    c_p1 = _round_up(F2, 128)
    r_p2 = _round_up(F1, 8)
    w_col = jnp.zeros((r_p2 + F2, c_p1 + C1), jnp.float32)
    w_col = w_col.at[0:F1, 0:F2].set(T2)
    w_col = w_col.at[0:F1, c_p1:c_p1 + C1].set(P1)
    w_col = w_col.at[r_p2:r_p2 + F2, 0:C2].set(P2)
    w_col = w_col.astype(jnp.bfloat16)

    # ---- packed operand 3: fc weights, bf16 ---------------------------------
    r_wf2 = _round_up(F2, 8)
    w_fc = jnp.zeros((r_wf2 + H, H), jnp.float32)
    w_fc = w_fc.at[0:F2, 0:H].set(wf1_pt.T)                    # flatten order = (c2, l2)
    w_fc = w_fc.at[r_wf2:r_wf2 + H, 0:NL].set(wf2_pt.T)
    w_fc = w_fc.astype(jnp.bfloat16)

    # ---- packed operand 4: BN gamma/beta (f32), conv ones pre-broadcast -----
    bn_w = max(F1, F2, H, NL)
    bn = jnp.zeros((8, bn_w), jnp.float32)
    bn = bn.at[0, 0:F1].set(jnp.repeat(jnp.ones((C1,), jnp.float32), L1))   # gamma1
    bn = bn.at[1, 0:F1].set(jnp.repeat(jnp.zeros((C1,), jnp.float32), L1))  # beta1
    bn = bn.at[2, 0:F2].set(jnp.repeat(jnp.ones((C2,), jnp.float32), L2))   # gamma2
    bn = bn.at[3, 0:F2].set(jnp.repeat(jnp.zeros((C2,), jnp.float32), L2))  # beta2
    bn = bn.at[4, 0:H].set(jnp.ones((H,), jnp.float32))                     # gamma3
    bn = bn.at[5, 0:H].set(jnp.zeros((H,), jnp.float32))                    # beta3
    bn = bn.at[6, 0:NL].set(jnp.ones((NL,), jnp.float32))                   # gamma4
    bn = bn.at[7, 0:NL].set(jnp.zeros((NL,), jnp.float32))                  # beta4

    params = {"w_row": w_row, "w_col": w_col, "w_fc": w_fc, "bn": bn}
    cfg = dict(L=L, L1=L1, C1=C1, F1=F1, L2=L2, C2=C2, F2=F2, H=H, NL=NL,
               r_p1t=r_p1t, r_p2t=r_p2t, c_p1=c_p1, r_p2=r_p2, r_wf2=r_wf2)
    return params, cfg


if __name__ == "__main__":
    key = jax.random.PRNGKey(0)
    num_labels = 3
    nbeats = 64
    batch = 4

    pkey, xkey = jax.random.split(key)
    params, cfg = make_params(pkey, num_labels=num_labels, nbeats=nbeats)

    # input: (batch, 1, nbeats) — same NCL layout as the PyTorch module
    x = jax.random.normal(xkey, (batch, 1, nbeats), jnp.float32)

    fwd = jax.jit(functools.partial(truncated_cnn_forward, cfg=cfg))
    out = jax.block_until_ready(fwd(x, params))

    assert out.shape == (batch, cfg["NL"]), f"unexpected output shape {out.shape}"
    assert bool(jnp.all(jnp.isfinite(out))), "non-finite values in output"
    print("KERNEL_OK")
</pallas_src>

<mosaic_0001>
module attributes {stable_mosaic.version = 11 : i64} {
  func.func @_truncated_cnn_kernel(%arg0: i32, %arg1: memref<4x64xf32, #tpu.memory_space<vmem>>, %arg2: memref<98x560xbf16, #tpu.memory_space<vmem>>, %arg3: memref<660x148xbf16, #tpu.memory_space<vmem>>, %arg4: memref<164x60xbf16, #tpu.memory_space<vmem>>, %arg5: memref<8x560xf32, #tpu.memory_space<vmem>>, %arg6: memref<4x3xf32, #tpu.memory_space<vmem>>) attributes {dimension_semantics = [#tpu.dimension_semantics<arbitrary>], iteration_bounds = array<i64: 1>, scalar_prefetch = 0 : i64, scratch_operands = 0 : i64, tpu.core_type = #tpu.core_type<tc>, window_params = [{pipeline_mode = #tpu.pipeline_mode<synchronous>, transform_indices = @transform_0, window_bounds = array<i64: 4, 64>}, {pipeline_mode = #tpu.pipeline_mode<synchronous>, transform_indices = @transform_1, window_bounds = array<i64: 98, 560>}, {pipeline_mode = #tpu.pipeline_mode<synchronous>, transform_indices = @transform_2, window_bounds = array<i64: 660, 148>}, {pipeline_mode = #tpu.pipeline_mode<synchronous>, transform_indices = @transform_3, window_bounds = array<i64: 164, 60>}, {pipeline_mode = #tpu.pipeline_mode<synchronous>, transform_indices = @transform_4, window_bounds = array<i64: 8, 560>}, {pipeline_mode = #tpu.pipeline_mode<synchronous>, transform_indices = @transform_5, window_bounds = array<i64: 4, 3>}]} {
    %c0 = arith.constant 0 : index
    %c0_0 = arith.constant 0 : index
    %0 = vector.load %arg2[%c0, %c0_0] : memref<98x560xbf16, #tpu.memory_space<vmem>>, vector<64x560xbf16>
    %c64 = arith.constant 64 : index
    %c0_1 = arith.constant 0 : index
    %1 = vector.load %arg2[%c64, %c0_1] : memref<98x560xbf16, #tpu.memory_space<vmem>>, vector<20x560xbf16>
    %2 = arith.extf %1 : vector<20x560xbf16> to vector<20x560xf32>
    %c88 = arith.constant 88 : index
    %c0_2 = arith.constant 0 : index
    %3 = vector.load %arg2[%c88, %c0_2] : memref<98x560xbf16, #tpu.memory_space<vmem>>, vector<10x100xbf16>
    %4 = arith.extf %3 : vector<10x100xbf16> to vector<10x100xf32>
    %c0_3 = arith.constant 0 : index
    %c0_4 = arith.constant 0 : index
    %5 = vector.load %arg3[%c0_3, %c0_4] : memref<660x148xbf16, #tpu.memory_space<vmem>>, vector<560x100xbf16>
    %c0_5 = arith.constant 0 : index
    %c128 = arith.constant 128 : index
    %6 = vector.load %arg3[%c0_5, %c128] : memref<660x148xbf16, #tpu.memory_space<vmem>>, vector<560x20xbf16>
    %7 = arith.extf %6 : vector<560x20xbf16> to vector<560x20xf32>
    %c560 = arith.constant 560 : index
    %c0_6 = arith.constant 0 : index
    %8 = vector.load %arg3[%c560, %c0_6] : memref<660x148xbf16, #tpu.memory_space<vmem>>, vector<100x10xbf16>
    %9 = arith.extf %8 : vector<100x10xbf16> to vector<100x10xf32>
    %c0_7 = arith.constant 0 : index
    %c0_8 = arith.constant 0 : index
    %10 = vector.load %arg4[%c0_7, %c0_8] : memref<164x60xbf16, #tpu.memory_space<vmem>>, vector<100x60xbf16>
    %c104 = arith.constant 104 : index
    %c0_9 = arith.constant 0 : index
    %11 = vector.load %arg4[%c104, %c0_9] : memref<164x60xbf16, #tpu.memory_space<vmem>>, vector<60x3xbf16>
    %c0_10 = arith.constant 0 : index
    %c0_11 = arith.constant 0 : index
    %12 = vector.load %arg1[%c0_10, %c0_11] : memref<4x64xf32, #tpu.memory_space<vmem>>, vector<4x64xf32>
    %13 = arith.truncf %12 : vector<4x64xf32> to vector<4x64xbf16>
    %cst = arith.constant dense<0.000000e+00> : vector<4x560xf32>
    %14 = tpu.matmul %13, %0, %cst {dimension_numbers = #tpu.dot_dimension_numbers<[1], [0], [0], [1], [0, 0, 1, 1], [], []>} : vector<4x64xbf16>, vector<64x560xbf16>, vector<4x560xf32> -> vector<4x560xf32>
    %c0_12 = arith.constant 0 : index
    %c0_13 = arith.constant 0 : index
    %15 = vector.load %arg5[%c0_12, %c0_13] : memref<8x560xf32, #tpu.memory_space<vmem>>, vector<1x560xf32>
    %c1 = arith.constant 1 : index
    %c0_14 = arith.constant 0 : index
    %16 = vector.load %arg5[%c1, %c0_14] : memref<8x560xf32, #tpu.memory_space<vmem>>, vector<1x560xf32>
    %cst_15 = arith.constant dense<0.000000e+00> : vector<560xf32>
    %17 = vector.multi_reduction <add>, %14, %cst_15 [0] : vector<4x560xf32> to vector<560xf32>
    %18 = vector.shape_cast %17 : vector<560xf32> to vector<1x560xf32>
    %cst_16 = arith.constant dense<0.000000e+00> : vector<1x20xf32>
    %19 = tpu.matmul %18, %7, %cst_16 {dimension_numbers = #tpu.dot_dimension_numbers<[1], [0], [0], [1], [0, 0, 1, 1], [], []>} : vector<1x560xf32>, vector<560x20xf32>, vector<1x20xf32> -> vector<1x20xf32>
    %cst_17 = arith.constant 0.00892857183 : f32
    %20 = vector.broadcast %cst_17 : f32 to vector<1x20xf32>
    %21 = arith.mulf %19, %20 : vector<1x20xf32>
    %cst_18 = arith.constant dense<0.000000e+00> : vector<1x560xf32>
    %22 = tpu.matmul %21, %2, %cst_18 {dimension_numbers = #tpu.dot_dimension_numbers<[1], [0], [0], [1], [0, 0, 1, 1], [], []>} : vector<1x20xf32>, vector<20x560xf32>, vector<1x560xf32> -> vector<1x560xf32>
    %23 = vector.broadcast %22 : vector<1x560xf32> to vector<4x560xf32>
    %24 = arith.subf %14, %23 : vector<4x560xf32>
    %25 = arith.mulf %24, %24 : vector<4x560xf32>
    %cst_19 = arith.constant dense<0.000000e+00> : vector<560xf32>
    %26 = vector.multi_reduction <add>, %25, %cst_19 [0] : vector<4x560xf32> to vector<560xf32>
    %27 = vector.shape_cast %26 : vector<560xf32> to vector<1x560xf32>
    %cst_20 = arith.constant dense<0.000000e+00> : vector<1x20xf32>
    %28 = tpu.matmul %27, %7, %cst_20 {dimension_numbers = #tpu.dot_dimension_numbers<[1], [0], [0], [1], [0, 0, 1, 1], [], []>} : vector<1x560xf32>, vector<560x20xf32>, vector<1x20xf32> -> vector<1x20xf32>
    %cst_21 = arith.constant 0.00892857183 : f32
    %29 = vector.broadcast %cst_21 : f32 to vector<1x20xf32>
    %30 = arith.mulf %28, %29 : vector<1x20xf32>
    %cst_22 = arith.constant 9.99999974E-6 : f32
    %31 = vector.broadcast %cst_22 : f32 to vector<1x20xf32>
    %32 = arith.addf %30, %31 : vector<1x20xf32>
    %33 = math.rsqrt %32 : vector<1x20xf32>
    %cst_23 = arith.constant dense<0.000000e+00> : vector<1x560xf32>
    %34 = tpu.matmul %33, %2, %cst_23 {dimension_numbers = #tpu.dot_dimension_numbers<[1], [0], [0], [1], [0, 0, 1, 1], [], []>} : vector<1x20xf32>, vector<20x560xf32>, vector<1x560xf32> -> vector<1x560xf32>
    %35 = arith.mulf %15, %34 : vector<1x560xf32>
    %36 = vector.broadcast %35 : vector<1x560xf32> to vector<4x560xf32>
    %37 = arith.mulf %24, %36 : vector<4x560xf32>
    %38 = vector.broadcast %16 : vector<1x560xf32> to vector<4x560xf32>
    %39 = arith.addf %37, %38 : vector<4x560xf32>
    %cst_24 = arith.constant 0.000000e+00 : f32
    %40 = vector.broadcast %cst_24 : f32 to vector<4x560xf32>
    %41 = arith.cmpf oge, %39, %40 : vector<4x560xf32>
    %cst_25 = arith.constant 0.00999999977 : f32
    %42 = vector.broadcast %cst_25 : f32 to vector<4x560xf32>
    %43 = arith.mulf %42, %39 : vector<4x560xf32>
    %44 = arith.select %41, %39, %43 : vector<4x560xi1>, vector<4x560xf32>
    %45 = arith.truncf %44 : vector<4x560xf32> to vector<4x560xbf16>
    %cst_26 = arith.constant dense<0.000000e+00> : vector<4x100xf32>
    %46 = tpu.matmul %45, %5, %cst_26 {dimension_numbers = #tpu.dot_dimension_numbers<[1], [0], [0], [1], [0, 0, 1, 1], [], []>} : vector<4x560xbf16>, vector<560x100xbf16>, vector<4x100xf32> -> vector<4x100xf32>
    %c2 = arith.constant 2 : index
    %c0_27 = arith.constant 0 : index
    %47 = vector.load %arg5[%c2, %c0_27] : memref<8x560xf32, #tpu.memory_space<vmem>>, vector<1x100xf32>
    %c3 = arith.constant 3 : index
    %c0_28 = arith.constant 0 : index
    %48 = vector.load %arg5[%c3, %c0_28] : memref<8x560xf32, #tpu.memory_space<vmem>>, vector<1x100xf32>
    %cst_29 = arith.constant dense<0.000000e+00> : vector<100xf32>
    %49 = vector.multi_reduction <add>, %46, %cst_29 [0] : vector<4x100xf32> to vector<100xf32>
    %50 = vector.shape_cast %49 : vector<100xf32> to vector<1x100xf32>
    %cst_30 = arith.constant dense<0.000000e+00> : vector<1x10xf32>
    %51 = tpu.matmul %50, %9, %cst_30 {dimension_numbers = #tpu.dot_dimension_numbers<[1], [0], [0], [1], [0, 0, 1, 1], [], []>} : vector<1x100xf32>, vector<100x10xf32>, vector<1x10xf32> -> vector<1x10xf32>
    %cst_31 = arith.constant 2.500000e-02 : f32
    %52 = vector.broadcast %cst_31 : f32 to vector<1x10xf32>
    %53 = arith.mulf %51, %52 : vector<1x10xf32>
    %cst_32 = arith.constant dense<0.000000e+00> : vector<1x100xf32>
    %54 = tpu.matmul %53, %4, %cst_32 {dimension_numbers = #tpu.dot_dimension_numbers<[1], [0], [0], [1], [0, 0, 1, 1], [], []>} : vector<1x10xf32>, vector<10x100xf32>, vector<1x100xf32> -> vector<1x100xf32>
    %55 = vector.broadcast %54 : vector<1x100xf32> to vector<4x100xf32>
    %56 = arith.subf %46, %55 : vector<4x100xf32>
    %57 = arith.mulf %56, %56 : vector<4x100xf32>
    %cst_33 = arith.constant dense<0.000000e+00> : vector<100xf32>
    %58 = vector.multi_reduction <add>, %57, %cst_33 [0] : vector<4x100xf32> to vector<100xf32>
    %59 = vector.shape_cast %58 : vector<100xf32> to vector<1x100xf32>
    %cst_34 = arith.constant dense<0.000000e+00> : vector<1x10xf32>
    %60 = tpu.matmul %59, %9, %cst_34 {dimension_numbers = #tpu.dot_dimension_numbers<[1], [0], [0], [1], [0, 0, 1, 1], [], []>} : vector<1x100xf32>, vector<100x10xf32>, vector<1x10xf32> -> vector<1x10xf32>
    %cst_35 = arith.constant 2.500000e-02 : f32
    %61 = vector.broadcast %cst_35 : f32 to vector<1x10xf32>
    %62 = arith.mulf %60, %61 : vector<1x10xf32>
    %cst_36 = arith.constant 9.99999974E-6 : f32
    %63 = vector.broadcast %cst_36 : f32 to vector<1x10xf32>
    %64 = arith.addf %62, %63 : vector<1x10xf32>
    %65 = math.rsqrt %64 : vector<1x10xf32>
    %cst_37 = arith.constant dense<0.000000e+00> : vector<1x100xf32>
    %66 = tpu.matmul %65, %4, %cst_37 {dimension_numbers = #tpu.dot_dimension_numbers<[1], [0], [0], [1], [0, 0, 1, 1], [], []>} : vector<1x10xf32>, vector<10x100xf32>, vector<1x100xf32> -> vector<1x100xf32>
    %67 = arith.mulf %47, %66 : vector<1x100xf32>
    %68 = vector.broadcast %67 : vector<1x100xf32> to vector<4x100xf32>
    %69 = arith.mulf %56, %68 : vector<4x100xf32>
    %70 = vector.broadcast %48 : vector<1x100xf32> to vector<4x100xf32>
    %71 = arith.addf %69, %70 : vector<4x100xf32>
    %cst_38 = arith.constant 0.000000e+00 : f32
    %72 = vector.broadcast %cst_38 : f32 to vector<4x100xf32>
    %73 = arith.cmpf oge, %71, %72 : vector<4x100xf32>
    %cst_39 = arith.constant 0.00999999977 : f32
    %74 = vector.broadcast %cst_39 : f32 to vector<4x100xf32>
    %75 = arith.mulf %74, %71 : vector<4x100xf32>
    %76 = arith.select %73, %71, %75 : vector<4x100xi1>, vector<4x100xf32>
    %77 = arith.truncf %76 : vector<4x100xf32> to vector<4x100xbf16>
    %cst_40 = arith.constant dense<0.000000e+00> : vector<4x60xf32>
    %78 = tpu.matmul %77, %10, %cst_40 {dimension_numbers = #tpu.dot_dimension_numbers<[1], [0], [0], [1], [0, 0, 1, 1], [], []>} : vector<4x100xbf16>, vector<100x60xbf16>, vector<4x60xf32> -> vector<4x60xf32>
    %c4 = arith.constant 4 : index
    %c0_41 = arith.constant 0 : index
    %79 = vector.load %arg5[%c4, %c0_41] : memref<8x560xf32, #tpu.memory_space<vmem>>, vector<1x60xf32>
    %c5 = arith.constant 5 : index
    %c0_42 = arith.constant 0 : index
    %80 = vector.load %arg5[%c5, %c0_42] : memref<8x560xf32, #tpu.memory_space<vmem>>, vector<1x60xf32>
    %cst_43 = arith.constant dense<0.000000e+00> : vector<60xf32>
    %81 = vector.multi_reduction <add>, %78, %cst_43 [0] : vector<4x60xf32> to vector<60xf32>
    %82 = vector.shape_cast %81 : vector<60xf32> to vector<1x60xf32>
    %cst_44 = arith.constant 4.000000e+00 : f32
    %83 = vector.broadcast %cst_44 : f32 to vector<1x60xf32>
    %84 = arith.divf %82, %83 : vector<1x60xf32>
    %85 = vector.broadcast %84 : vector<1x60xf32> to vector<4x60xf32>
    %86 = arith.subf %78, %85 : vector<4x60xf32>
    %87 = arith.mulf %86, %86 : vector<4x60xf32>
    %cst_45 = arith.constant dense<0.000000e+00> : vector<60xf32>
    %88 = vector.multi_reduction <add>, %87, %cst_45 [0] : vector<4x60xf32> to vector<60xf32>
    %89 = vector.shape_cast %88 : vector<60xf32> to vector<1x60xf32>
    %cst_46 = arith.constant 4.000000e+00 : f32
    %90 = vector.broadcast %cst_46 : f32 to vector<1x60xf32>
    %91 = arith.divf %89, %90 : vector<1x60xf32>
    %cst_47 = arith.constant 9.99999974E-6 : f32
    %92 = vector.broadcast %cst_47 : f32 to vector<1x60xf32>
    %93 = arith.addf %91, %92 : vector<1x60xf32>
    %94 = math.rsqrt %93 : vector<1x60xf32>
    %95 = arith.mulf %79, %94 : vector<1x60xf32>
    %96 = vector.broadcast %95 : vector<1x60xf32> to vector<4x60xf32>
    %97 = arith.mulf %86, %96 : vector<4x60xf32>
    %98 = vector.broadcast %80 : vector<1x60xf32> to vector<4x60xf32>
    %99 = arith.addf %97, %98 : vector<4x60xf32>
    %cst_48 = arith.constant 0.000000e+00 : f32
    %100 = vector.broadcast %cst_48 : f32 to vector<4x60xf32>
    %101 = arith.cmpf oge, %99, %100 : vector<4x60xf32>
    %cst_49 = arith.constant 0.00999999977 : f32
    %102 = vector.broadcast %cst_49 : f32 to vector<4x60xf32>
    %103 = arith.mulf %102, %99 : vector<4x60xf32>
    %104 = arith.select %101, %99, %103 : vector<4x60xi1>, vector<4x60xf32>
    %105 = arith.truncf %104 : vector<4x60xf32> to vector<4x60xbf16>
    %cst_50 = arith.constant dense<0.000000e+00> : vector<4x3xf32>
    %106 = tpu.matmul %105, %11, %cst_50 {dimension_numbers = #tpu.dot_dimension_numbers<[1], [0], [0], [1], [0, 0, 1, 1], [], []>} : vector<4x60xbf16>, vector<60x3xbf16>, vector<4x3xf32> -> vector<4x3xf32>
    %c6 = arith.constant 6 : index
    %c0_51 = arith.constant 0 : index
    %107 = vector.load %arg5[%c6, %c0_51] : memref<8x560xf32, #tpu.memory_space<vmem>>, vector<1x3xf32>
    %c7 = arith.constant 7 : index
    %c0_52 = arith.constant 0 : index
    %108 = vector.load %arg5[%c7, %c0_52] : memref<8x560xf32, #tpu.memory_space<vmem>>, vector<1x3xf32>
    %cst_53 = arith.constant dense<0.000000e+00> : vector<3xf32>
    %109 = vector.multi_reduction <add>, %106, %cst_53 [0] : vector<4x3xf32> to vector<3xf32>
    %110 = vector.shape_cast %109 : vector<3xf32> to vector<1x3xf32>
    %cst_54 = arith.constant 4.000000e+00 : f32
    %111 = vector.broadcast %cst_54 : f32 to vector<1x3xf32>
    %112 = arith.divf %110, %111 : vector<1x3xf32>
    %113 = vector.broadcast %112 : vector<1x3xf32> to vector<4x3xf32>
    %114 = arith.subf %106, %113 : vector<4x3xf32>
    %115 = arith.mulf %114, %114 : vector<4x3xf32>
    %cst_55 = arith.constant dense<0.000000e+00> : vector<3xf32>
    %116 = vector.multi_reduction <add>, %115, %cst_55 [0] : vector<4x3xf32> to vector<3xf32>
    %117 = vector.shape_cast %116 : vector<3xf32> to vector<1x3xf32>
    %cst_56 = arith.constant 4.000000e+00 : f32
    %118 = vector.broadcast %cst_56 : f32 to vector<1x3xf32>
    %119 = arith.divf %117, %118 : vector<1x3xf32>
    %cst_57 = arith.constant 9.99999974E-6 : f32
    %120 = vector.broadcast %cst_57 : f32 to vector<1x3xf32>
    %121 = arith.addf %119, %120 : vector<1x3xf32>
    %122 = math.rsqrt %121 : vector<1x3xf32>
    %123 = arith.mulf %107, %122 : vector<1x3xf32>
    %124 = vector.broadcast %123 : vector<1x3xf32> to vector<4x3xf32>
    %125 = arith.mulf %114, %124 : vector<4x3xf32>
    %126 = vector.broadcast %108 : vector<1x3xf32> to vector<4x3xf32>
    %127 = arith.addf %125, %126 : vector<4x3xf32>
    %c0_58 = arith.constant 0 : index
    %c0_59 = arith.constant 0 : index
    %128 = vector.load %arg6[%c0_58, %c0_59] : memref<4x3xf32, #tpu.memory_space<vmem>>, vector<4x3xf32>
    tpu.vector_store %arg6[%c0_58, %c0_59], %127 {strides = array<i32>} : memref<4x3xf32, #tpu.memory_space<vmem>>, vector<4x3xf32>,
    return
  }
  func.func @transform_0(%arg0: i32) -> (i32, i32) {
    %c0_i32 = arith.constant 0 : i32
    %c0_i32_0 = arith.constant 0 : i32
    %c0_i32_1 = arith.constant 0 : i32
    return %c0_i32, %c0_i32_0 : i32, i32
  }
  func.func @transform_1(%arg0: i32) -> (i32, i32) {
    %c0_i32 = arith.constant 0 : i32
    %c0_i32_0 = arith.constant 0 : i32
    %c0_i32_1 = arith.constant 0 : i32
    return %c0_i32, %c0_i32_0 : i32, i32
  }
  func.func @transform_2(%arg0: i32) -> (i32, i32) {
    %c0_i32 = arith.constant 0 : i32
    %c0_i32_0 = arith.constant 0 : i32
    %c0_i32_1 = arith.constant 0 : i32
    return %c0_i32, %c0_i32_0 : i32, i32
  }
  func.func @transform_3(%arg0: i32) -> (i32, i32) {
    %c0_i32 = arith.constant 0 : i32
    %c0_i32_0 = arith.constant 0 : i32
    %c0_i32_1 = arith.constant 0 : i32
    return %c0_i32, %c0_i32_0 : i32, i32
  }
  func.func @transform_4(%arg0: i32) -> (i32, i32) {
    %c0_i32 = arith.constant 0 : i32
    %c0_i32_0 = arith.constant 0 : i32
    %c0_i32_1 = arith.constant 0 : i32
    return %c0_i32, %c0_i32_0 : i32, i32
  }
  func.func @transform_5(%arg0: i32) -> (i32, i32) {
    %c0_i32 = arith.constant 0 : i32
    %c0_i32_0 = arith.constant 0 : i32
    %c0_i32_1 = arith.constant 0 : i32
    return %c0_i32, %c0_i32_0 : i32, i32
  }
}

</mosaic_0001>

<llo_original>
// kernel: truncated_cnn_forward.1
$region0: #{truncated_cnn_forward.1}
  #allocation0 [shape = 'u32[]', space=smem, size = 0x4, offset = 0x4, fixed_abs, tag = 'smem constant byte address 0x4 - core index']
  #allocation1 [shape = 'u32[72,128]{1,0:T(1,128)}', space=vmem, size = 0x9000, scoped, tag = 'internal scratch']
  %s0 = inlined_call_operand.vmem [shape: f32[4,64], index: 0, kind: input, shape index: {}]
  %s1 = inlined_call_operand.vmem [shape: bf16[98,560], index: 1, kind: input, shape index: {}]
  %s2 = inlined_call_operand.vmem [shape: bf16[660,148], index: 2, kind: input, shape index: {}]
  %s3 = inlined_call_operand.vmem [shape: bf16[164,60], index: 3, kind: input, shape index: {}]
  %s4 = inlined_call_operand.vmem [shape: f32[8,560], index: 4, kind: input, shape index: {}]
  %s5 = inlined_call_operand.hbm [shape: f32[4,3], index: 5, kind: output, shape index: {}]
  %s6 = sld [smem:[#allocation0]]
  $region30: #{truncated_cnn_forward.1} parent=0
    _
  %s8 = ssub.s32 1, %s6
  %s9 = scalar_select 0, %s8, %s6
  $region1: #{truncated_cnn_forward.1} parent=0
    #allocation2 [shape = 'u8[2048]{0}', space=vmem, size = 0x800, scoped, tag = 'output window, operand 0, single buffered']
    #allocation3 [shape = 's32[1]{0}', space=sflag, size = 0x4, scoped, tag = 'scoped memory for truncated_cnn_forward.1']
    %10 = vsyncpa [#allocation3], 0
    // Predicated region
    $region2: #{truncated_cnn_forward.1} parent=1 // pred_check
      _
    $region3: #{truncated_cnn_forward.1} parent=1 // pred_check_branch
      %12 = sbr.rel (0) target = $region5
    $region4: #{truncated_cnn_forward.1} parent=1 // pred_region
      _
    $region5: #{truncated_cnn_forward.1} parent=1 // pred_fallthru
      _
    // Predicated region
    $region6: #{truncated_cnn_forward.1} parent=1 // pred_check
      _
    $region7: #{truncated_cnn_forward.1} parent=1 // pred_check_branch
      %14 = sbr.rel (0) target = $region9
    $region8: #{truncated_cnn_forward.1} parent=1 // pred_region
      _
    $region9: #{truncated_cnn_forward.1} parent=1 // pred_fallthru
      _
    // Predicated region
    $region10: #{truncated_cnn_forward.1} parent=1 // pred_check
      _
    $region11: #{truncated_cnn_forward.1} parent=1 // pred_check_branch
      %16 = sbr.rel (0) target = $region13
    $region12: #{truncated_cnn_forward.1} parent=1 // pred_region
      _
    $region13: #{truncated_cnn_forward.1} parent=1 // pred_fallthru
      _
    // Predicated region
    $region14: #{truncated_cnn_forward.1} parent=1 // pred_check
      _
    $region15: #{truncated_cnn_forward.1} parent=1 // pred_check_branch
      %18 = sbr.rel (0) target = $region17
    $region16: #{truncated_cnn_forward.1} parent=1 // pred_region
      _
    $region17: #{truncated_cnn_forward.1} parent=1 // pred_fallthru
      _
    // Predicated region
    $region18: #{truncated_cnn_forward.1} parent=1 // pred_check
      _
    $region19: #{truncated_cnn_forward.1} parent=1 // pred_check_branch
      %20 = sbr.rel (0) target = $region21
    $region20: #{truncated_cnn_forward.1} parent=1 // pred_region
      _
    $region21: #{truncated_cnn_forward.1} parent=1 // pred_fallthru
      _
    %v22 = vld [vmem:[%s1] sm:$0xff]
    %v23 = vld [vmem:[%s1 + $0x8] sm:$0xff]
    %v24 = vld [vmem:[%s1 + $0x10] sm:$0xf]
    %v25 = vld [vmem:[%s1 + $0x14] sm:$0xff]
    %v26 = vld [vmem:[%s1 + $0x1c] sm:$0xff]
    %v27 = vld [vmem:[%s1 + $0x24] sm:$0xf]
    %v28 = vld [vmem:[%s1 + $0x28] sm:$0xff]
    %v29 = vld [vmem:[%s1 + $0x30] sm:$0xff]
    %v30 = vld [vmem:[%s1 + $0x38] sm:$0xf]
    %v31 = vld [vmem:[%s1 + $0x3c] sm:$0xff]
    %v32 = vld [vmem:[%s1 + $0x44] sm:$0xff]
    %v33 = vld [vmem:[%s1 + $0x4c] sm:$0xf]
    %v34 = vld [vmem:[%s1 + $0x50] sm:$0xff]
    %v35 = vld [vmem:[%s1 + $0x58] sm:$0xff]
    %v36 = vld [vmem:[%s1 + $0x60] sm:$0xf]
    %v37 = vld [vmem:[%s1 + $0x64] sm:$0xff]
    %v38 = vld [vmem:[%s1 + $0x6c] sm:$0xff]
    %v39 = vld [vmem:[%s1 + $0x74] sm:$0xf]
    %v40 = vld [vmem:[%s1 + $0x78] sm:$0xff]
    %v41 = vld [vmem:[%s1 + $0x80] sm:$0xff]
    %v42 = vld [vmem:[%s1 + $0x88] sm:$0xf]
    %v43 = vld [vmem:[%s1 + $0x8c] sm:$0xff]
    %v44 = vld [vmem:[%s1 + $0x94] sm:$0xff]
    %v45 = vld [vmem:[%s1 + $0x9c] sm:$0xf]
    %v46 = vld [vmem:[%s1 + $0xa0] sm:$0xff]
    %v47 = vld [vmem:[%s1 + $0xa8] sm:$0xff]
    %v48 = vld [vmem:[%s1 + $0xb0] sm:$0xf]
    %v49 = vld [vmem:[%s1 + $0xb4] sm:$0xff]
    %v50 = vld [vmem:[%s1 + $0xbc] sm:$0xff]
    %v51 = vld [vmem:[%s1 + $0xc4] sm:$0xf]
    %v52 = vld [vmem:[%s1 + $0xc8] sm:$0x33]
    %v53 = vld [vmem:[%s1 + $0xd0] sm:$0x33]
    %v54 = vld [vmem:[%s1 + $0xd8] sm:$0x3]
    %v55 = vunpack.c.l.bf16 %v46
    %v56 = vunpack.c.h.bf16 %v46
    %v57 = vunpack.c.l.bf16 %v47
    %v58 = vunpack.c.h.bf16 %v47
    %v59 = vunpack.c.l.bf16 %v48
    %v60 = vunpack.c.l.bf16 %v49
    %v61 = vunpack.c.h.bf16 %v49
    %v62 = vunpack.c.l.bf16 %v50
    %v63 = vunpack.c.h.bf16 %v50
    %v64 = vunpack.c.l.bf16 %v51
    %v65 = vunpack.c.l.bf16 %v52
    %v66 = vunpack.c.h.bf16 %v52
    %v67 = vunpack.c.l.bf16 %v53
    %v68 = vunpack.c.h.bf16 %v53
    %v69 = vunpack.c.l.bf16 %v54
    %v70 = vld [vmem:[%s1 + $0xdc] sm:$0xf]
    %v71 = vld [vmem:[%s1 + $0xf0] sm:$0x1]
    %v72 = vunpack.c.l.bf16 %v70
    %v73 = vunpack.c.l.bf16 %v71
    %v74 = vld [vmem:[%s2] sm:$0xf]
    %v75 = vld [vmem:[%s2 + $0x8] sm:$0xf]
    %v76 = vld [vmem:[%s2 + $0x10] sm:$0xf]
    %v77 = vld [vmem:[%s2 + $0x18] sm:$0xf]
    %v78 = vld [vmem:[%s2 + $0x20] sm:$0xf]
    %v79 = vld [vmem:[%s2 + $0x28] sm:$0xf]
    %v80 = vld [vmem:[%s2 + $0x30] sm:$0xf]
    %v81 = vld [vmem:[%s2 + $0x38] sm:$0xf]
    %v82 = vld [vmem:[%s2 + $0x40] sm:$0xf]
    %v83 = vld [vmem:[%s2 + $0x48] sm:$0xf]
    %v84 = vld [vmem:[%s2 + $0x50] sm:$0xf]
    %v85 = vld [vmem:[%s2 + $0x58] sm:$0xf]
    %v86 = vld [vmem:[%s2 + $0x60] sm:$0xf]
    %v87 = vld [vmem:[%s2 + $0x68] sm:$0xf]
    %v88 = vld [vmem:[%s2 + $0x70] sm:$0xf]
    %v89 = vld [vmem:[%s2 + $0x78] sm:$0xf]
    %v90 = vld [vmem:[%s2 + $0x80] sm:$0xf]
    %v91 = vld [vmem:[%s2 + $0x88] sm:$0xf]
    %v92 = vld [vmem:[%s2 + $0x90] sm:$0xf]
    %v93 = vld [vmem:[%s2 + $0x98] sm:$0xf]
    %v94 = vld [vmem:[%s2 + $0xa0] sm:$0xf]
    %v95 = vld [vmem:[%s2 + $0xa8] sm:$0xf]
    %v96 = vld [vmem:[%s2 + $0xb0] sm:$0xf]
    %v97 = vld [vmem:[%s2 + $0xb8] sm:$0xf]
    %v98 = vld [vmem:[%s2 + $0xc0] sm:$0xf]
    %v99 = vld [vmem:[%s2 + $0xc8] sm:$0xf]
    %v100 = vld [vmem:[%s2 + $0xd0] sm:$0xf]
    %v101 = vld [vmem:[%s2 + $0xd8] sm:$0xf]
    %v102 = vld [vmem:[%s2 + $0xe0] sm:$0xf]
    %v103 = vld [vmem:[%s2 + $0xe8] sm:$0xf]
    %v104 = vld [vmem:[%s2 + $0xf0] sm:$0xf]
    %v105 = vld [vmem:[%s2 + $0xf8] sm:$0xf]
    %v106 = vld [vmem:[%s2 + $0x100] sm:$0xf]
    %v107 = vld [vmem:[%s2 + $0x108] sm:$0xf]
    %v108 = vld [vmem:[%s2 + $0x110] sm:$0xf]
    %v109 = vld [vmem:[%s2 + $0x118] sm:$0xf]
    %v110 = vld [vmem:[%s2 + $0x120] sm:$0xf]
    %v111 = vld [vmem:[%s2 + $0x128] sm:$0xf]
    %v112 = vld [vmem:[%s2 + $0x130] sm:$0xf]
    %v113 = vld [vmem:[%s2 + $0x138] sm:$0xf]
    %v114 = vld [vmem:[%s2 + $0x140] sm:$0xf]
    %v115 = vld [vmem:[%s2 + $0x148] sm:$0xf]
    %v116 = vld [vmem:[%s2 + $0x150] sm:$0xf]
    %v117 = vld [vmem:[%s2 + $0x158] sm:$0xf]
    %v118 = vld [vmem:[%s2 + $0x160] sm:$0xf]
    %v119 = vld [vmem:[%s2 + $0x168] sm:$0xf]
    %v120 = vld [vmem:[%s2 + $0x170] sm:$0xf]
    %v121 = vld [vmem:[%s2 + $0x178] sm:$0xf]
    %v122 = vld [vmem:[%s2 + $0x180] sm:$0xf]
    %v123 = vld [vmem:[%s2 + $0x188] sm:$0xf]
    %v124 = vld [vmem:[%s2 + $0x190] sm:$0xf]
    %v125 = vld [vmem:[%s2 + $0x198] sm:$0xf]
    %v126 = vld [vmem:[%s2 + $0x1a0] sm:$0xf]
    %v127 = vld [vmem:[%s2 + $0x1a8] sm:$0xf]
    %v128 = vld [vmem:[%s2 + $0x1b0] sm:$0xf]
    %v129 = vld [vmem:[%s2 + $0x1b8] sm:$0xf]
    %v130 = vld [vmem:[%s2 + $0x1c0] sm:$0xf]
    %v131 = vld [vmem:[%s2 + $0x1c8] sm:$0xf]
    %v132 = vld [vmem:[%s2 + $0x1d0] sm:$0xf]
    %v133 = vld [vmem:[%s2 + $0x1d8] sm:$0xf]
    %v134 = vld [vmem:[%s2 + $0x1e0] sm:$0xf]
    %v135 = vld [vmem:[%s2 + $0x1e8] sm:$0xf]
    %v136 = vld [vmem:[%s2 + $0x1f0] sm:$0xf]
    %v137 = vld [vmem:[%s2 + $0x1f8] sm:$0xf]
    %v138 = vld [vmem:[%s2 + $0x200] sm:$0xf]
    %v139 = vld [vmem:[%s2 + $0x208] sm:$0xf]
    %v140 = vld [vmem:[%s2 + $0x210] sm:$0xf]
    %v141 = vld [vmem:[%s2 + $0x218] sm:$0xf]
    %v142 = vld [vmem:[%s2 + $0x220] sm:$0xf]
    %v143 = vld [vmem:[%s2 + $0x228] sm:$0xf]
    %v144 = vld [vmem:[%s2 + $0x4] sm:$0xf]
    %v145 = vld [vmem:[%s2 + $0xc] sm:$0xf]
    %v146 = vld [vmem:[%s2 + $0x14] sm:$0xf]
    %v147 = vld [vmem:[%s2 + $0x1c] sm:$0xf]
    %v148 = vld [vmem:[%s2 + $0x24] sm:$0xf]
    %v149 = vld [vmem:[%s2 + $0x2c] sm:$0xf]
    %v150 = vld [vmem:[%s2 + $0x34] sm:$0xf]
    %v151 = vld [vmem:[%s2 + $0x3c] sm:$0xf]
    %v152 = vld [vmem:[%s2 + $0x44] sm:$0xf]
    %v153 = vld [vmem:[%s2 + $0x4c] sm:$0xf]
    %v154 = vld [vmem:[%s2 + $0x54] sm:$0xf]
    %v155 = vld [vmem:[%s2 + $0x5c] sm:$0xf]
    %v156 = vld [vmem:[%s2 + $0x64] sm:$0xf]
    %v157 = vld [vmem:[%s2 + $0x6c] sm:$0xf]
    %v158 = vld [vmem:[%s2 + $0x74] sm:$0xf]
    %v159 = vld [vmem:[%s2 + $0x7c] sm:$0xf]
    %v160 = vld [vmem:[%s2 + $0x84] sm:$0xf]
    %v161 = vld [vmem:[%s2 + $0x8c] sm:$0xf]
    %v162 = vld [vmem:[%s2 + $0x94] sm:$0xf]
    %v163 = vld [vmem:[%s2 + $0x9c] sm:$0xf]
    %v164 = vld [vmem:[%s2 + $0xa4] sm:$0xf]
    %v165 = vld [vmem:[%s2 + $0xac] sm:$0xf]
    %v166 = vld [vmem:[%s2 + $0xb4] sm:$0xf]
    %v167 = vld [vmem:[%s2 + $0xbc] sm:$0xf]
    %v168 = vld [vmem:[%s2 + $0xc4] sm:$0xf]
    %v169 = vld [vmem:[%s2 + $0xcc] sm:$0xf]
    %v170 = vld [vmem:[%s2 + $0xd4] sm:$0xf]
    %v171 = vld [vmem:[%s2 + $0xdc] sm:$0xf]
    %v172 = vld [vmem:[%s2 + $0xe4] sm:$0xf]
    %v173 = vld [vmem:[%s2 + $0xec] sm:$0xf]
    %v174 = vld [vmem:[%s2 + $0xf4] sm:$0xf]
    %v175 = vld [vmem:[%s2 + $0xfc] sm:$0xf]
    %v176 = vld [vmem:[%s2 + $0x104] sm:$0xf]
    %v177 = vld [vmem:[%s2 + $0x10c] sm:$0xf]
    %v178 = vld [vmem:[%s2 + $0x114] sm:$0xf]
    %v179 = vld [vmem:[%s2 + $0x11c] sm:$0xf]
    %v180 = vld [vmem:[%s2 + $0x124] sm:$0xf]
    %v181 = vld [vmem:[%s2 + $0x12c] sm:$0xf]
    %v182 = vld [vmem:[%s2 + $0x134] sm:$0xf]
    %v183 = vld [vmem:[%s2 + $0x13c] sm:$0xf]
    %v184 = vld [vmem:[%s2 + $0x144] sm:$0xf]
    %v185 = vld [vmem:[%s2 + $0x14c] sm:$0xf]
    %v186 = vld [vmem:[%s2 + $0x154] sm:$0xf]
    %v187 = vld [vmem:[%s2 + $0x15c] sm:$0xf]
    %v188 = vld [vmem:[%s2 + $0x164] sm:$0xf]
    %v189 = vld [vmem:[%s2 + $0x16c] sm:$0xf]
    %v190 = vld [vmem:[%s2 + $0x174] sm:$0xf]
    %v191 = vld [vmem:[%s2 + $0x17c] sm:$0xf]
    %v192 = vld [vmem:[%s2 + $0x184] sm:$0xf]
    %v193 = vld [vmem:[%s2 + $0x18c] sm:$0xf]
    %v194 = vld [vmem:[%s2 + $0x194] sm:$0xf]
    %v195 = vld [vmem:[%s2 + $0x19c] sm:$0xf]
    %v196 = vld [vmem:[%s2 + $0x1a4] sm:$0xf]
    %v197 = vld [vmem:[%s2 + $0x1ac] sm:$0xf]
    %v198 = vld [vmem:[%s2 + $0x1b4] sm:$0xf]
    %v199 = vld [vmem:[%s2 + $0x1bc] sm:$0xf]
    %v200 = vld [vmem:[%s2 + $0x1c4] sm:$0xf]
    %v201 = vld [vmem:[%s2 + $0x1cc] sm:$0xf]
    %v202 = vld [vmem:[%s2 + $0x1d4] sm:$0xf]
    %v203 = vld [vmem:[%s2 + $0x1dc] sm:$0xf]
    %v204 = vld [vmem:[%s2 + $0x1e4] sm:$0xf]
    %v205 = vld [vmem:[%s2 + $0x1ec] sm:$0xf]
    %v206 = vld [vmem:[%s2 + $0x1f4] sm:$0xf]
    %v207 = vld [vmem:[%s2 + $0x1fc] sm:$0xf]
    %v208 = vld [vmem:[%s2 + $0x204] sm:$0xf]
    %v209 = vld [vmem:[%s2 + $0x20c] sm:$0xf]
    %v210 = vld [vmem:[%s2 + $0x214] sm:$0xf]
    %v211 = vld [vmem:[%s2 + $0x21c] sm:$0xf]
    %v212 = vld [vmem:[%s2 + $0x224] sm:$0xf]
    %v213 = vld [vmem:[%s2 + $0x22c] sm:$0xf]
    %v214 = vunpack.c.l.bf16 %v144
    %v215 = vunpack.c.l.bf16 %v145
    %v216 = vunpack.c.l.bf16 %v146
    %v217 = vunpack.c.l.bf16 %v147
    %v218 = vunpack.c.l.bf16 %v148
    %v219 = vunpack.c.l.bf16 %v149
    %v220 = vunpack.c.l.bf16 %v150
    %v221 = vunpack.c.l.bf16 %v151
    %v222 = vunpack.c.l.bf16 %v152
    %v223 = vunpack.c.l.bf16 %v153
    %v224 = vunpack.c.l.bf16 %v154
    %v225 = vunpack.c.l.bf16 %v155
    %v226 = vunpack.c.l.bf16 %v156
    %v227 = vunpack.c.l.bf16 %v157
    %v228 = vunpack.c.l.bf16 %v158
    %v229 = vunpack.c.l.bf16 %v159
    %v230 = vunpack.c.l.bf16 %v160
    %v231 = vunpack.c.l.bf16 %v161
    %v232 = vunpack.c.l.bf16 %v162
    %v233 = vunpack.c.l.bf16 %v163
    %v234 = vunpack.c.l.bf16 %v164
    %v235 = vunpack.c.l.bf16 %v165
    %v236 = vunpack.c.l.bf16 %v166
    %v237 = vunpack.c.l.bf16 %v167
    %v238 = vunpack.c.l.bf16 %v168
    %v239 = vunpack.c.l.bf16 %v169
    %v240 = vunpack.c.l.bf16 %v170
    %v241 = vunpack.c.l.bf16 %v171
    %v242 = vunpack.c.l.bf16 %v172
    %v243 = vunpack.c.l.bf16 %v173
    %v244 = vunpack.c.l.bf16 %v174
    %v245 = vunpack.c.l.bf16 %v175
    %v246 = vunpack.c.l.bf16 %v176
    %v247 = vunpack.c.l.bf16 %v177
    %v248 = vunpack.c.l.bf16 %v178
    %v249 = vunpack.c.l.bf16 %v179
    %v250 = vunpack.c.l.bf16 %v180
    %v251 = vunpack.c.l.bf16 %v181
    %v252 = vunpack.c.l.bf16 %v182
    %v253 = vunpack.c.l.bf16 %v183
    %v254 = vunpack.c.l.bf16 %v184
    %v255 = vunpack.c.l.bf16 %v185
    %v256 = vunpack.c.l.bf16 %v186
    %v257 = vunpack.c.l.bf16 %v187
    %v258 = vunpack.c.l.bf16 %v188
    %v259 = vunpack.c.l.bf16 %v189
    %v260 = vunpack.c.l.bf16 %v190
    %v261 = vunpack.c.l.bf16 %v191
    %v262 = vunpack.c.l.bf16 %v192
    %v263 = vunpack.c.l.bf16 %v193
    %v264 = vunpack.c.l.bf16 %v194
    %v265 = vunpack.c.l.bf16 %v195
    %v266 = vunpack.c.l.bf16 %v196
    %v267 = vunpack.c.l.bf16 %v197
    %v268 = vunpack.c.l.bf16 %v198
    %v269 = vunpack.c.l.bf16 %v199
    %v270 = vunpack.c.l.bf16 %v200
    %v271 = vunpack.c.l.bf16 %v201
    %v272 = vunpack.c.l.bf16 %v202
    %v273 = vunpack.c.l.bf16 %v203
    %v274 = vunpack.c.l.bf16 %v204
    %v275 = vunpack.c.l.bf16 %v205
    %v276 = vunpack.c.l.bf16 %v206
    %v277 = vunpack.c.l.bf16 %v207
    %v278 = vunpack.c.l.bf16 %v208
    %v279 = vunpack.c.l.bf16 %v209
    %v280 = vunpack.c.l.bf16 %v210
    %v281 = vunpack.c.l.bf16 %v211
    %v282 = vunpack.c.l.bf16 %v212
    %v283 = vunpack.c.l.bf16 %v213
    %v284 = vld [vmem:[%s2 + $0x230] sm:$0xf]
    %v285 = vld [vmem:[%s2 + $0x238] sm:$0xf]
    %v286 = vld [vmem:[%s2 + $0x240] sm:$0xf]
    %v287 = vld [vmem:[%s2 + $0x248] sm:$0xf]
    %v288 = vld [vmem:[%s2 + $0x250] sm:$0xf]
    %v289 = vld [vmem:[%s2 + $0x258] sm:$0xf]
    %v290 = vld [vmem:[%s2 + $0x260] sm:$0xf]
    %v291 = vld [vmem:[%s2 + $0x268] sm:$0xf]
    %v292 = vld [vmem:[%s2 + $0x270] sm:$0xf]
    %v293 = vld [vmem:[%s2 + $0x278] sm:$0xf]
    %v294 = vld [vmem:[%s2 + $0x280] sm:$0xf]
    %v295 = vld [vmem:[%s2 + $0x288] sm:$0xf]
    %v296 = vld [vmem:[%s2 + $0x290] sm:$0x3]
    %v297 = vunpack.c.l.bf16 %v284
    %v298 = vunpack.c.l.bf16 %v285
    %v299 = vunpack.c.l.bf16 %v286
    %v300 = vunpack.c.l.bf16 %v287
    %v301 = vunpack.c.l.bf16 %v288
    %v302 = vunpack.c.l.bf16 %v289
    %v303 = vunpack.c.l.bf16 %v290
    %v304 = vunpack.c.l.bf16 %v291
    %v305 = vunpack.c.l.bf16 %v292
    %v306 = vunpack.c.l.bf16 %v293
    %v307 = vunpack.c.l.bf16 %v294
    %v308 = vunpack.c.l.bf16 %v295
    %v309 = vunpack.c.l.bf16 %v296
    %v310 = vld [vmem:[%s3] sm:$0xf]
    %v311 = vld [vmem:[%s3 + $0x4] sm:$0xf]
    %v312 = vld [vmem:[%s3 + $0x8] sm:$0xf]
    %v313 = vld [vmem:[%s3 + $0xc] sm:$0xf]
    %v314 = vld [vmem:[%s3 + $0x10] sm:$0xf]
    %v315 = vld [vmem:[%s3 + $0x14] sm:$0xf]
    %v316 = vld [vmem:[%s3 + $0x18] sm:$0xf]
    %v317 = vld [vmem:[%s3 + $0x1c] sm:$0xf]
    %v318 = vld [vmem:[%s3 + $0x20] sm:$0xf]
    %v319 = vld [vmem:[%s3 + $0x24] sm:$0xf]
    %v320 = vld [vmem:[%s3 + $0x28] sm:$0xf]
    %v321 = vld [vmem:[%s3 + $0x2c] sm:$0xf]
    %v322 = vld [vmem:[%s3 + $0x30] sm:$0x3]
    %v323 = vld [vmem:[%s3 + $0x34] sm:$0xf]
    %v324 = vld [vmem:[%s3 + $0x38] sm:$0xf]
    %v325 = vld [vmem:[%s3 + $0x3c] sm:$0xf]
    %v326 = vld [vmem:[%s3 + $0x40] sm:$0xf]
    %v327 = vld [vmem:[%s3 + $0x44] sm:$0xf]
    %v328 = vld [vmem:[%s3 + $0x48] sm:$0xf]
    %v329 = vld [vmem:[%s3 + $0x4c] sm:$0xf]
    %v330 = vld [vmem:[%s3 + $0x50] sm:$0x3]
    %v331 = vld [vmem:[%s0] sm:$0xf]
    %v332 = vpack.c.bf16 %v331, %v331
    %v357 = vunpack.c.l.b16 %v22
    %v358 = vunpack.c.h.b16 %v22
    %v359 = vunpack.c.l.b16 %v23
    %v360 = vunpack.c.h.b16 %v23
    %v361 = vunpack.c.l.b16 %v24
    %v362 = vunpack.c.l.b16 %v25
    %v363 = vunpack.c.h.b16 %v25
    %v364 = vunpack.c.l.b16 %v26
    %v365 = vunpack.c.h.b16 %v26
    %v366 = vunpack.c.l.b16 %v27
    %v367 = vunpack.c.l.b16 %v28
    %v368 = vunpack.c.h.b16 %v28
    %v369 = vunpack.c.l.b16 %v29
    %v370 = vunpack.c.h.b16 %v29
    %v371 = vunpack.c.l.b16 %v30
    %v372 = vunpack.c.l.b16 %v31
    %v373 = vunpack.c.h.b16 %v31
    %v374 = vunpack.c.l.b16 %v32
    %v375 = vunpack.c.h.b16 %v32
    %v376 = vunpack.c.l.b16 %v33
    %v377 = vunpack.c.l.b16 %v34
    %v378 = vunpack.c.h.b16 %v34
    %v379 = vunpack.c.l.b16 %v35
    %v380 = vunpack.c.h.b16 %v35
    %v381 = vunpack.c.l.b16 %v36
    %v382 = vunpack.c.l.b16 %v37
    %v383 = vunpack.c.h.b16 %v37
    %v384 = vunpack.c.l.b16 %v38
    %v385 = vunpack.c.h.b16 %v38
    %v386 = vunpack.c.l.b16 %v39
    %v387 = vunpack.c.l.b16 %v40
    %v388 = vunpack.c.h.b16 %v40
    %v389 = vunpack.c.l.b16 %v41
    %v390 = vunpack.c.h.b16 %v41
    %v391 = vunpack.c.l.b16 %v42
    %v392 = vunpack.c.l.b16 %v43
    %v393 = vunpack.c.h.b16 %v43
    %v394 = vunpack.c.l.b16 %v44
    %v395 = vunpack.c.h.b16 %v44
    %v396 = vunpack.c.l.b16 %v45
    %v397 = vpack.c.b16 %v362, %v357
    %v398 = vpack.c.b16 %v363, %v358
    %v399 = vpack.c.b16 %v364, %v359
    %v400 = vpack.c.b16 %v365, %v360
    %v401 = vpack.c.b16 %v366, %v361
    %v402 = vpack.c.b16 %v372, %v367
    %v403 = vpack.c.b16 %v373, %v368
    %v404 = vpack.c.b16 %v374, %v369
    %v405 = vpack.c.b16 %v375, %v370
    %v406 = vpack.c.b16 %v376, %v371
    %v407 = vpack.c.b16 %v382, %v377
    %v408 = vpack.c.b16 %v383, %v378
    %v409 = vpack.c.b16 %v384, %v379
    %v410 = vpack.c.b16 %v385, %v380
    %v411 = vpack.c.b16 %v386, %v381
    %v412 = vpack.c.b16 %v392, %v387
    %v413 = vpack.c.b16 %v393, %v388
    %v414 = vpack.c.b16 %v394, %v389
    %v415 = vpack.c.b16 %v395, %v390
    %v416 = vpack.c.b16 %v396, %v391
    %vm437 = vcmask 523264
    %v439 = vsel %vm437, %v332, 0
    %441 = vmatpush.bf16.msra.mxu0 0
    %442 = vmatpush.bf16.msra.mxu0 0
    %443 = vmatpush.bf16.msra.mxu0 0
    %444 = vmatpush.bf16.msra.mxu0 0
    %445 = vmatpush.bf16.msra.mxu0 %v412
    %446 = vmatpush.bf16.msra.mxu0 %v407
    %447 = vmatpush.bf16.msra.mxu0 %v402
    %448 = vmatpush.bf16.msra.mxu0 %v397
    %449 = vmatmul.bf16.gmra.mxu0 %v439
    %v450 = vpop.f32.mrf.mxu0
    %v451 = vadd.f32 0.0, %v450
    %v452 = vpop.f32.mrf.mxu0
    %453 = vdwg.mxu0
    %454 = vmatpush.bf16.msra.mxu0 0
    %455 = vmatpush.bf16.msra.mxu0 0
    %456 = vmatpush.bf16.msra.mxu0 0
    %457 = vmatpush.bf16.msra.mxu0 0
    %458 = vmatpush.bf16.msra.mxu0 %v413
    %459 = vmatpush.bf16.msra.mxu0 %v408
    %460 = vmatpush.bf16.msra.mxu0 %v403
    %461 = vmatpush.bf16.msra.mxu0 %v398
    %462 = vmatmul.bf16.gmra.mxu0 %v439
    %v463 = vpop.f32.mrf.mxu0
    %v464 = vadd.f32 0.0, %v463
    %v465 = vpop.f32.mrf.mxu0
    %466 = vdwg.mxu0
    %467 = vmatpush.bf16.msra.mxu0 0
    %468 = vmatpush.bf16.msra.mxu0 0
    %469 = vmatpush.bf16.msra.mxu0 0
    %470 = vmatpush.bf16.msra.mxu0 0
    %471 = vmatpush.bf16.msra.mxu0 %v414
    %472 = vmatpush.bf16.msra.mxu0 %v409
    %473 = vmatpush.bf16.msra.mxu0 %v404
    %474 = vmatpush.bf16.msra.mxu0 %v399
    %475 = vmatmul.bf16.gmra.mxu0 %v439
    %v476 = vpop.f32.mrf.mxu0
    %v477 = vadd.f32 0.0, %v476
    %v478 = vpop.f32.mrf.mxu0
    %479 = vdwg.mxu0
    %480 = vmatpush.bf16.msra.mxu0 0
    %481 = vmatpush.bf16.msra.mxu0 0
    %482 = vmatpush.bf16.msra.mxu0 0
    %483 = vmatpush.bf16.msra.mxu0 0
    %484 = vmatpush.bf16.msra.mxu0 %v415
    %485 = vmatpush.bf16.msra.mxu0 %v410
    %486 = vmatpush.bf16.msra.mxu0 %v405
    %487 = vmatpush.bf16.msra.mxu0 %v400
    %488 = vmatmul.bf16.gmra.mxu0 %v439
    %v489 = vpop.f32.mrf.mxu0
    %v490 = vadd.f32 0.0, %v489
    %v491 = vpop.f32.mrf.mxu0
    %492 = vdwg.mxu0
    %493 = vmatpush.bf16.msra.mxu0 0
    %494 = vmatpush.bf16.msra.mxu0 0
    %495 = vmatpush.bf16.msra.mxu0 0
    %496 = vmatpush.bf16.msra.mxu0 0
    %497 = vmatpush.bf16.msra.mxu0 %v416
    %498 = vmatpush.bf16.msra.mxu0 %v411
    %499 = vmatpush.bf16.msra.mxu0 %v406
    %500 = vmatpush.bf16.msra.mxu0 %v401
    %501 = vmatmul.bf16.gmra.mxu0 %v439
    %v502 = vpop.f32.mrf.mxu0
    %v503 = vadd.f32 0.0, %v502
    %v504 = vpop.f32.mrf.mxu0
    %505 = vdwg.mxu0
    %v506 = vld [vmem:[%s4] ss:$8 sm:$0xf]
    %v507 = vld [vmem:[%s4] ss:$8 sm:$0x10]
    %v508 = vor.u32 %v506, %v507
    %s509 = scalar_lea.vmem %s4, 1
    %v510 = vld [vmem:[%s509] ss:$8 sm:$0xf]
    %v511 = vld [vmem:[%s509] ss:$8 sm:$0x10]
    %v512 = vor.u32 %v510, %v511
    %vm513 = vcmask 1043456
    %v514 = vsel %vm513, %v451, 0.0
    %v515 = vrot.slane %v514, 4
    %v516 = vadd.f32 %v514, %v515
    %v517 = vrot.slane %v516, 2
    %v518 = vadd.f32 %v516, %v517
    %v519 = vrot.slane %v518, 1
    %v520 = vadd.f32 %v518, %v519
    %v521 = vsel %vm513, %v464, 0.0
    %v522 = vrot.slane %v521, 4
    %v523 = vadd.f32 %v521, %v522
    %v524 = vrot.slane %v523, 2
    %v525 = vadd.f32 %v523, %v524
    %v526 = vrot.slane %v525, 1
    %v527 = vadd.f32 %v525, %v526
    %v528 = vsel %vm513, %v477, 0.0
    %v529 = vrot.slane %v528, 4
    %v530 = vadd.f32 %v528, %v529
    %v531 = vrot.slane %v530, 2
    %v532 = vadd.f32 %v530, %v531
    %v533 = vrot.slane %v532, 1
    %v534 = vadd.f32 %v532, %v533
    %v535 = vsel %vm513, %v490, 0.0
    %v536 = vrot.slane %v535, 4
    %v537 = vadd.f32 %v535, %v536
    %v538 = vrot.slane %v537, 2
    %v539 = vadd.f32 %v537, %v538
    %v540 = vrot.slane %v539, 1
    %v541 = vadd.f32 %v539, %v540
    %vm542 = vcmask 388096
    %v543 = vsel %vm542, %v503, 0.0
    %v544 = vrot.slane %v543, 4
    %v545 = vadd.f32 %v543, %v544
    %v546 = vrot.slane %v545, 2
    %v547 = vadd.f32 %v545, %v546
    %v548 = vrot.slane %v547, 1
    %v549 = vadd.f32 %v547, %v548
    %vm550 = vcmask 392192
    %v552 = vsel %vm550, %v549, 0
    %554 = vmatpush.msra.mxu0 %v229
    %555 = vmatpush.msra.mxu0 %v228
    %556 = vmatpush.msra.mxu0 %v227
    %557 = vmatpush.msra.mxu0 %v226
    %558 = vmatpush.msra.mxu0 %v225
    %559 = vmatpush.msra.mxu0 %v224
    %560 = vmatpush.msra.mxu0 %v223
    %561 = vmatpush.msra.mxu0 %v222
    %562 = vmatpush.msra.mxu0 %v221
    %563 = vmatpush.msra.mxu0 %v220
    %564 = vmatpush.msra.mxu0 %v219
    %565 = vmatpush.msra.mxu0 %v218
    %566 = vmatpush.msra.mxu0 %v217
    %567 = vmatpush.msra.mxu0 %v216
    %568 = vmatpush.msra.mxu0 %v215
    %569 = vmatpush.msra.mxu0 %v214
    %570 = vmatmul.f32.gmra.mxu0 %v520
    %v571 = vpop.f32.mrf.mxu0
    %v572 = vadd.f32 0.0, %v571
    %573 = vdwg.mxu0
    %574 = vmatpush.msra.mxu0 %v245
    %575 = vmatpush.msra.mxu0 %v244
    %576 = vmatpush.msra.mxu0 %v243
    %577 = vmatpush.msra.mxu0 %v242
    %578 = vmatpush.msra.mxu0 %v241
    %579 = vmatpush.msra.mxu0 %v240
    %580 = vmatpush.msra.mxu0 %v239
    %581 = vmatpush.msra.mxu0 %v238
    %582 = vmatpush.msra.mxu0 %v237
    %583 = vmatpush.msra.mxu0 %v236
    %584 = vmatpush.msra.mxu0 %v235
    %585 = vmatpush.msra.mxu0 %v234
    %586 = vmatpush.msra.mxu0 %v233
    %587 = vmatpush.msra.mxu0 %v232
    %588 = vmatpush.msra.mxu0 %v231
    %589 = vmatpush.msra.mxu0 %v230
    %590 = vmatmul.f32.gmra.mxu0 %v527
    %v591 = vpop.f32.mrf.mxu0
    %v592 = vadd.f32 %v572, %v591
    %593 = vdwg.mxu0
    %594 = vmatpush.msra.mxu0 %v261
    %595 = vmatpush.msra.mxu0 %v260
    %596 = vmatpush.msra.mxu0 %v259
    %597 = vmatpush.msra.mxu0 %v258
    %598 = vmatpush.msra.mxu0 %v257
    %599 = vmatpush.msra.mxu0 %v256
    %600 = vmatpush.msra.mxu0 %v255
    %601 = vmatpush.msra.mxu0 %v254
    %602 = vmatpush.msra.mxu0 %v253
    %603 = vmatpush.msra.mxu0 %v252
    %604 = vmatpush.msra.mxu0 %v251
    %605 = vmatpush.msra.mxu0 %v250
    %606 = vmatpush.msra.mxu0 %v249
    %607 = vmatpush.msra.mxu0 %v248
    %608 = vmatpush.msra.mxu0 %v247
    %609 = vmatpush.msra.mxu0 %v246
    %610 = vmatmul.f32.gmra.mxu0 %v534
    %v611 = vpop.f32.mrf.mxu0
    %v612 = vadd.f32 %v592, %v611
    %613 = vdwg.mxu0
    %614 = vmatpush.msra.mxu0 %v277
    %615 = vmatpush.msra.mxu0 %v276
    %616 = vmatpush.msra.mxu0 %v275
    %617 = vmatpush.msra.mxu0 %v274
    %618 = vmatpush.msra.mxu0 %v273
    %619 = vmatpush.msra.mxu0 %v272
    %620 = vmatpush.msra.mxu0 %v271
    %621 = vmatpush.msra.mxu0 %v270
    %622 = vmatpush.msra.mxu0 %v269
    %623 = vmatpush.msra.mxu0 %v268
    %624 = vmatpush.msra.mxu0 %v267
    %625 = vmatpush.msra.mxu0 %v266
    %626 = vmatpush.msra.mxu0 %v265
    %627 = vmatpush.msra.mxu0 %v264
    %628 = vmatpush.msra.mxu0 %v263
    %629 = vmatpush.msra.mxu0 %v262
    %630 = vmatmul.f32.gmra.mxu0 %v541
    %v631 = vpop.f32.mrf.mxu0
    %v632 = vadd.f32 %v612, %v631
    %633 = vdwg.mxu0
    %634 = vmatpush.msra.mxu0 0.0
    %635 = vmatpush.msra.mxu0 0.0
    %636 = vmatpush.msra.mxu0 0.0
    %637 = vmatpush.msra.mxu0 0.0
    %638 = vmatpush.msra.mxu0 0.0
    %639 = vmatpush.msra.mxu0 0.0
    %640 = vmatpush.msra.mxu0 0.0
    %641 = vmatpush.msra.mxu0 0.0
    %642 = vmatpush.msra.mxu0 0.0
    %643 = vmatpush.msra.mxu0 0.0
    %644 = vmatpush.msra.mxu0 %v283
    %645 = vmatpush.msra.mxu0 %v282
    %646 = vmatpush.msra.mxu0 %v281
    %647 = vmatpush.msra.mxu0 %v280
    %648 = vmatpush.msra.mxu0 %v279
    %649 = vmatpush.msra.mxu0 %v278
    %650 = vmatmul.f32.gmra.mxu0 %v552
    %v651 = vpop.f32.mrf.mxu0
    %v652 = vadd.f32 %v632, %v651
    %653 = vdwg.mxu0
    %v654 = vmul.f32 %v652, 0.008928572
    %vm655 = vcmask 162816
    %v657 = vsel %vm655, %v654, 0
    %v660 = vsel %vm513, %v65, 0
    %v663 = vsel %vm513, %v66, 0
    %v666 = vsel %vm513, %v67, 0
    %v669 = vsel %vm513, %v68, 0
    %v672 = vsel %vm513, %v69, 0
    %674 = vmatpush.msra.mxu0 0.0
    %675 = vmatpush.msra.mxu0 0.0
    %676 = vmatpush.msra.mxu0 0.0
    %677 = vmatpush.msra.mxu0 0.0
    %678 = vmatpush.msra.mxu0 0.0
    %679 = vmatpush.msra.mxu0 0.0
    %680 = vmatpush.msra.mxu0 0.0
    %681 = vmatpush.msra.mxu0 0.0
    %682 = vmatpush.msra.mxu0 0.0
    %683 = vmatpush.msra.mxu0 0.0
    %684 = vmatpush.msra.mxu0 0.0
    %685 = vmatpush.msra.mxu0 0.0
    %686 = vmatpush.msra.mxu0 0.0
    %687 = vmatpush.msra.mxu0 %v660
    %688 = vmatpush.msra.mxu0 %v60
    %689 = vmatpush.msra.mxu0 %v55
    %690 = vmatmul.f32.gmra.mxu0 %v657
    %v691 = vpop.f32.mrf.mxu0
    %v692 = vadd.f32 0.0, %v691
    %693 = vdwg.mxu0
    %694 = vmatpush.msra.mxu0 0.0
    %695 = vmatpush.msra.mxu0 0.0
    %696 = vmatpush.msra.mxu0 0.0
    %697 = vmatpush.msra.mxu0 0.0
    %698 = vmatpush.msra.mxu0 0.0
    %699 = vmatpush.msra.mxu0 0.0
    %700 = vmatpush.msra.mxu0 0.0
    %701 = vmatpush.msra.mxu0 0.0
    %702 = vmatpush.msra.mxu0 0.0
    %703 = vmatpush.msra.mxu0 0.0
    %704 = vmatpush.msra.mxu0 0.0
    %705 = vmatpush.msra.mxu0 0.0
    %706 = vmatpush.msra.mxu0 0.0
    %707 = vmatpush.msra.mxu0 %v663
    %708 = vmatpush.msra.mxu0 %v61
    %709 = vmatpush.msra.mxu0 %v56
    %710 = vmatmul.f32.gmra.mxu0 %v657
    %v711 = vpop.f32.mrf.mxu0
    %v712 = vadd.f32 0.0, %v711
    %713 = vdwg.mxu0
    %714 = vmatpush.msra.mxu0 0.0
    %715 = vmatpush.msra.mxu0 0.0
    %716 = vmatpush.msra.mxu0 0.0
    %717 = vmatpush.msra.mxu0 0.0
    %718 = vmatpush.msra.mxu0 0.0
    %719 = vmatpush.msra.mxu0 0.0
    %720 = vmatpush.msra.mxu0 0.0
    %721 = vmatpush.msra.mxu0 0.0
    %722 = vmatpush.msra.mxu0 0.0
    %723 = vmatpush.msra.mxu0 0.0
    %724 = vmatpush.msra.mxu0 0.0
    %725 = vmatpush.msra.mxu0 0.0
    %726 = vmatpush.msra.mxu0 0.0
    %727 = vmatpush.msra.mxu0 %v666
    %728 = vmatpush.msra.mxu0 %v62
    %729 = vmatpush.msra.mxu0 %v57
    %730 = vmatmul.f32.gmra.mxu0 %v657
    %v731 = vpop.f32.mrf.mxu0
    %v732 = vadd.f32 0.0, %v731
    %733 = vdwg.mxu0
    %734 = vmatpush.msra.mxu0 0.0
    %735 = vmatpush.msra.mxu0 0.0
    %736 = vmatpush.msra.mxu0 0.0
    %737 = vmatpush.msra.mxu0 0.0
    %738 = vmatpush.msra.mxu0 0.0
    %739 = vmatpush.msra.mxu0 0.0
    %740 = vmatpush.msra.mxu0 0.0
    %741 = vmatpush.msra.mxu0 0.0
    %742 = vmatpush.msra.mxu0 0.0
    %743 = vmatpush.msra.mxu0 0.0
    %744 = vmatpush.msra.mxu0 0.0
    %745 = vmatpush.msra.mxu0 0.0
    %746 = vmatpush.msra.mxu0 0.0
    %747 = vmatpush.msra.mxu0 %v669
    %748 = vmatpush.msra.mxu0 %v63
    %749 = vmatpush.msra.mxu0 %v58
    %750 = vmatmul.f32.gmra.mxu0 %v657
    %v751 = vpop.f32.mrf.mxu0
    %v752 = vadd.f32 0.0, %v751
    %753 = vdwg.mxu0
    %754 = vmatpush.msra.mxu0 0.0
    %755 = vmatpush.msra.mxu0 0.0
    %756 = vmatpush.msra.mxu0 0.0
    %757 = vmatpush.msra.mxu0 0.0
    %758 = vmatpush.msra.mxu0 0.0
    %759 = vmatpush.msra.mxu0 0.0
    %760 = vmatpush.msra.mxu0 0.0
    %761 = vmatpush.msra.mxu0 0.0
    %762 = vmatpush.msra.mxu0 0.0
    %763 = vmatpush.msra.mxu0 0.0
    %764 = vmatpush.msra.mxu0 0.0
    %765 = vmatpush.msra.mxu0 0.0
    %766 = vmatpush.msra.mxu0 0.0
    %767 = vmatpush.msra.mxu0 %v672
    %768 = vmatpush.msra.mxu0 %v64
    %769 = vmatpush.msra.mxu0 %v59
    %770 = vmatmul.f32.gmra.mxu0 %v657
    %v771 = vpop.f32.mrf.mxu0
    %v772 = vadd.f32 0.0, %v771
    %773 = vdwg.mxu0
    %v774 = vperm.slane %v692, 0
    %v775 = vperm.slane %v712, 0
    %v776 = vperm.slane %v732, 0
    %v777 = vperm.slane %v752, 0
    %v778 = vperm.slane %v772, 0
    %v779 = vsub.f32 %v451, %v774
    %v780 = vsub.f32 %v464, %v775
    %v781 = vsub.f32 %v477, %v776
    %v782 = vsub.f32 %v490, %v777
    %v783 = vsub.f32 %v503, %v778
    %v784 = vmul.f32 %v779, %v779
    %v785 = vmul.f32 %v780, %v780
    %v786 = vmul.f32 %v781, %v781
    %v787 = vmul.f32 %v782, %v782
    %v788 = vmul.f32 %v783, %v783
    %v789 = vsel %vm513, %v784, 0.0
    %v790 = vrot.slane %v789, 4
    %v791 = vadd.f32 %v789, %v790
    %v792 = vrot.slane %v791, 2
    %v793 = vadd.f32 %v791, %v792
    %v794 = vrot.slane %v793, 1
    %v795 = vadd.f32 %v793, %v794
    %v796 = vsel %vm513, %v785, 0.0
    %v797 = vrot.slane %v796, 4
    %v798 = vadd.f32 %v796, %v797
    %v799 = vrot.slane %v798, 2
    %v800 = vadd.f32 %v798, %v799
    %v801 = vrot.slane %v800, 1
    %v802 = vadd.f32 %v800, %v801
    %v803 = vsel %vm513, %v786, 0.0
    %v804 = vrot.slane %v803, 4
    %v805 = vadd.f32 %v803, %v804
    %v806 = vrot.slane %v805, 2
    %v807 = vadd.f32 %v805, %v806
    %v808 = vrot.slane %v807, 1
    %v809 = vadd.f32 %v807, %v808
    %v810 = vsel %vm513, %v787, 0.0
    %v811 = vrot.slane %v810, 4
    %v812 = vadd.f32 %v810, %v811
    %v813 = vrot.slane %v812, 2
    %v814 = vadd.f32 %v812, %v813
    %v815 = vrot.slane %v814, 1
    %v816 = vadd.f32 %v814, %v815
    %v817 = vsel %vm542, %v788, 0.0
    %v818 = vrot.slane %v817, 4
    %v819 = vadd.f32 %v817, %v818
    %v820 = vrot.slane %v819, 2
    %v821 = vadd.f32 %v819, %v820
    %v822 = vrot.slane %v821, 1
    %v823 = vadd.f32 %v821, %v822
    %v825 = vsel %vm550, %v823, 0
    %827 = vmatpush.msra.mxu0 %v229
    %828 = vmatpush.msra.mxu0 %v228
    %829 = vmatpush.msra.mxu0 %v227
    %830 = vmatpush.msra.mxu0 %v226
    %831 = vmatpush.msra.mxu0 %v225
    %832 = vmatpush.msra.mxu0 %v224
    %833 = vmatpush.msra.mxu0 %v223
    %834 = vmatpush.msra.mxu0 %v222
    %835 = vmatpush.msra.mxu0 %v221
    %836 = vmatpush.msra.mxu0 %v220
    %837 = vmatpush.msra.mxu0 %v219
    %838 = vmatpush.msra.mxu0 %v218
    %839 = vmatpush.msra.mxu0 %v217
    %840 = vmatpush.msra.mxu0 %v216
    %841 = vmatpush.msra.mxu0 %v215
    %842 = vmatpush.msra.mxu0 %v214
    %843 = vmatmul.f32.gmra.mxu0 %v795
    %v844 = vpop.f32.mrf.mxu0
    %v845 = vadd.f32 0.0, %v844
    %846 = vdwg.mxu0
    %847 = vmatpush.msra.mxu0 %v245
    %848 = vmatpush.msra.mxu0 %v244
    %849 = vmatpush.msra.mxu0 %v243
    %850 = vmatpush.msra.mxu0 %v242
    %851 = vmatpush.msra.mxu0 %v241
    %852 = vmatpush.msra.mxu0 %v240
    %853 = vmatpush.msra.mxu0 %v239
    %854 = vmatpush.msra.mxu0 %v238
    %855 = vmatpush.msra.mxu0 %v237
    %856 = vmatpush.msra.mxu0 %v236
    %857 = vmatpush.msra.mxu0 %v235
    %858 = vmatpush.msra.mxu0 %v234
    %859 = vmatpush.msra.mxu0 %v233
    %860 = vmatpush.msra.mxu0 %v232
    %861 = vmatpush.msra.mxu0 %v231
    %862 = vmatpush.msra.mxu0 %v230
    %863 = vmatmul.f32.gmra.mxu0 %v802
    %v864 = vpop.f32.mrf.mxu0
    %v865 = vadd.f32 %v845, %v864
    %866 = vdwg.mxu0
    %867 = vmatpush.msra.mxu0 %v261
    %868 = vmatpush.msra.mxu0 %v260
    %869 = vmatpush.msra.mxu0 %v259
    %870 = vmatpush.msra.mxu0 %v258
    %871 = vmatpush.msra.mxu0 %v257
    %872 = vmatpush.msra.mxu0 %v256
    %873 = vmatpush.msra.mxu0 %v255
    %874 = vmatpush.msra.mxu0 %v254
    %875 = vmatpush.msra.mxu0 %v253
    %876 = vmatpush.msra.mxu0 %v252
    %877 = vmatpush.msra.mxu0 %v251
    %878 = vmatpush.msra.mxu0 %v250
    %879 = vmatpush.msra.mxu0 %v249
    %880 = vmatpush.msra.mxu0 %v248
    %881 = vmatpush.msra.mxu0 %v247
    %882 = vmatpush.msra.mxu0 %v246
    %883 = vmatmul.f32.gmra.mxu0 %v809
    %v884 = vpop.f32.mrf.mxu0
    %v885 = vadd.f32 %v865, %v884
    %886 = vdwg.mxu0
    %887 = vmatpush.msra.mxu0 %v277
    %888 = vmatpush.msra.mxu0 %v276
    %889 = vmatpush.msra.mxu0 %v275
    %890 = vmatpush.msra.mxu0 %v274
    %891 = vmatpush.msra.mxu0 %v273
    %892 = vmatpush.msra.mxu0 %v272
    %893 = vmatpush.msra.mxu0 %v271
    %894 = vmatpush.msra.mxu0 %v270
    %895 = vmatpush.msra.mxu0 %v269
    %896 = vmatpush.msra.mxu0 %v268
    %897 = vmatpush.msra.mxu0 %v267
    %898 = vmatpush.msra.mxu0 %v266
    %899 = vmatpush.msra.mxu0 %v265
    %900 = vmatpush.msra.mxu0 %v264
    %901 = vmatpush.msra.mxu0 %v263
    %902 = vmatpush.msra.mxu0 %v262
    %903 = vmatmul.f32.gmra.mxu0 %v816
    %v904 = vpop.f32.mrf.mxu0
    %v905 = vadd.f32 %v885, %v904
    %906 = vdwg.mxu0
    %907 = vmatpush.msra.mxu0 0.0
    %908 = vmatpush.msra.mxu0 0.0
    %909 = vmatpush.msra.mxu0 0.0
    %910 = vmatpush.msra.mxu0 0.0
    %911 = vmatpush.msra.mxu0 0.0
    %912 = vmatpush.msra.mxu0 0.0
    %913 = vmatpush.msra.mxu0 0.0
    %914 = vmatpush.msra.mxu0 0.0
    %915 = vmatpush.msra.mxu0 0.0
    %916 = vmatpush.msra.mxu0 0.0
    %917 = vmatpush.msra.mxu0 %v283
    %918 = vmatpush.msra.mxu0 %v282
    %919 = vmatpush.msra.mxu0 %v281
    %920 = vmatpush.msra.mxu0 %v280
    %921 = vmatpush.msra.mxu0 %v279
    %922 = vmatpush.msra.mxu0 %v278
    %923 = vmatmul.f32.gmra.mxu0 %v825
    %v924 = vpop.f32.mrf.mxu0
    %v925 = vadd.f32 %v905, %v924
    %926 = vdwg.mxu0
    %v927 = vmul.f32 %v925, 0.008928572
    %v928 = vadd.f32 %v927, 1e-05
    %v929 = vrsqrt.pop %v928
    %v930 = vmul.f32 %v929, %v928
    %v931 = vmul.f32 %v930, %v929
    %v932 = vmul.f32 0.5, %v931
    %v933 = vsub.f32 1.5, %v932
    %v934 = vmul.f32 %v929, %v933
    %vm935 = vweird.f32 %v928
    %vm936 = vweird.f32 %v929
    %vm937 = vmor %vm935, %vm936
    %v938 = vsel %vm937, %v929, %v934
    %v940 = vsel %vm655, %v938, 0
    %942 = vmatpush.msra.mxu0 0.0
    %943 = vmatpush.msra.mxu0 0.0
    %944 = vmatpush.msra.mxu0 0.0
    %945 = vmatpush.msra.mxu0 0.0
    %946 = vmatpush.msra.mxu0 0.0
    %947 = vmatpush.msra.mxu0 0.0
    %948 = vmatpush.msra.mxu0 0.0
    %949 = vmatpush.msra.mxu0 0.0
    %950 = vmatpush.msra.mxu0 0.0
    %951 = vmatpush.msra.mxu0 0.0
    %952 = vmatpush.msra.mxu0 0.0
    %953 = vmatpush.msra.mxu0 0.0
    %954 = vmatpush.msra.mxu0 0.0
    %955 = vmatpush.msra.mxu0 %v660
    %956 = vmatpush.msra.mxu0 %v60
    %957 = vmatpush.msra.mxu0 %v55
    %958 = vmatmul.f32.gmra.mxu0 %v940
    %v959 = vpop.f32.mrf.mxu0
    %v960 = vadd.f32 0.0, %v959
    %961 = vdwg.mxu0
    %962 = vmatpush.msra.mxu0 0.0
    %963 = vmatpush.msra.mxu0 0.0
    %964 = vmatpush.msra.mxu0 0.0
    %965 = vmatpush.msra.mxu0 0.0
    %966 = vmatpush.msra.mxu0 0.0
    %967 = vmatpush.msra.mxu0 0.0
    %968 = vmatpush.msra.mxu0 0.0
    %969 = vmatpush.msra.mxu0 0.0
    %970 = vmatpush.msra.mxu0 0.0
    %971 = vmatpush.msra.mxu0 0.0
    %972 = vmatpush.msra.mxu0 0.0
    %973 = vmatpush.msra.mxu0 0.0
    %974 = vmatpush.msra.mxu0 0.0
    %975 = vmatpush.msra.mxu0 %v663
    %976 = vmatpush.msra.mxu0 %v61
    %977 = vmatpush.msra.mxu0 %v56
    %978 = vmatmul.f32.gmra.mxu0 %v940
    %v979 = vpop.f32.mrf.mxu0
    %v980 = vadd.f32 0.0, %v979
    %981 = vdwg.mxu0
    %982 = vmatpush.msra.mxu0 0.0
    %983 = vmatpush.msra.mxu0 0.0
    %984 = vmatpush.msra.mxu0 0.0
    %985 = vmatpush.msra.mxu0 0.0
    %986 = vmatpush.msra.mxu0 0.0
    %987 = vmatpush.msra.mxu0 0.0
    %988 = vmatpush.msra.mxu0 0.0
    %989 = vmatpush.msra.mxu0 0.0
    %990 = vmatpush.msra.mxu0 0.0
    %991 = vmatpush.msra.mxu0 0.0
    %992 = vmatpush.msra.mxu0 0.0
    %993 = vmatpush.msra.mxu0 0.0
    %994 = vmatpush.msra.mxu0 0.0
    %995 = vmatpush.msra.mxu0 %v666
    %996 = vmatpush.msra.mxu0 %v62
    %997 = vmatpush.msra.mxu0 %v57
    %998 = vmatmul.f32.gmra.mxu0 %v940
    %v999 = vpop.f32.mrf.mxu0
    %v1000 = vadd.f32 0.0, %v999
    %1001 = vdwg.mxu0
    %1002 = vmatpush.msra.mxu0 0.0
    %1003 = vmatpush.msra.mxu0 0.0
    %1004 = vmatpush.msra.mxu0 0.0
    %1005 = vmatpush.msra.mxu0 0.0
    %1006 = vmatpush.msra.mxu0 0.0
    %1007 = vmatpush.msra.mxu0 0.0
    %1008 = vmatpush.msra.mxu0 0.0
    %1009 = vmatpush.msra.mxu0 0.0
    %1010 = vmatpush.msra.mxu0 0.0
    %1011 = vmatpush.msra.mxu0 0.0
    %1012 = vmatpush.msra.mxu0 0.0
    %1013 = vmatpush.msra.mxu0 0.0
    %1014 = vmatpush.msra.mxu0 0.0
    %1015 = vmatpush.msra.mxu0 %v669
    %1016 = vmatpush.msra.mxu0 %v63
    %1017 = vmatpush.msra.mxu0 %v58
    %1018 = vmatmul.f32.gmra.mxu0 %v940
    %v1019 = vpop.f32.mrf.mxu0
    %v1020 = vadd.f32 0.0, %v1019
    %1021 = vdwg.mxu0
    %1022 = vmatpush.msra.mxu0 0.0
    %1023 = vmatpush.msra.mxu0 0.0
    %1024 = vmatpush.msra.mxu0 0.0
    %1025 = vmatpush.msra.mxu0 0.0
    %1026 = vmatpush.msra.mxu0 0.0
    %1027 = vmatpush.msra.mxu0 0.0
    %1028 = vmatpush.msra.mxu0 0.0
    %1029 = vmatpush.msra.mxu0 0.0
    %1030 = vmatpush.msra.mxu0 0.0
    %1031 = vmatpush.msra.mxu0 0.0
    %1032 = vmatpush.msra.mxu0 0.0
    %1033 = vmatpush.msra.mxu0 0.0
    %1034 = vmatpush.msra.mxu0 0.0
    %1035 = vmatpush.msra.mxu0 %v672
    %1036 = vmatpush.msra.mxu0 %v64
    %1037 = vmatpush.msra.mxu0 %v59
    %1038 = vmatmul.f32.gmra.mxu0 %v940
    %v1039 = vpop.f32.mrf.mxu0
    %v1040 = vadd.f32 0.0, %v1039
    %1041 = vdwg.mxu0
    %v1047 = vrot.slane %v980, 7
    %v1048 = vrot.slane %v1000, 6
    %v1049 = vrot.slane %v1020, 5
    %v1050 = vrot.slane %v1040, 4
    %vm1051 = vcmask 1040384
    %v1052 = vsel %vm1051, %v960, %v1047
    %vm1053 = vcmask 1041408
    %v1054 = vsel %vm1053, %v1052, %v1048
    %vm1055 = vcmask 1043459
    %v1056 = vsel %vm1055, %v1049, %v1050
    %vm1057 = vcmask 1042432
    %v1058 = vsel %vm1057, %v1054, %v1056
    %v1060 = vmul.f32 %v508, %v1058
    %v1062 = vperm.slane %v1060, 0
    %v1063 = vperm.slane %v1060, 1
    %v1064 = vperm.slane %v1060, 2
    %v1065 = vperm.slane %v1060, 3
    %v1066 = vperm.slane %v1060, 4
    %v1072 = vmul.f32 %v779, %v1062
    %v1073 = vmul.f32 %v780, %v1063
    %v1074 = vmul.f32 %v781, %v1064
    %v1075 = vmul.f32 %v782, %v1065
    %v1076 = vmul.f32 %v783, %v1066
    %v1078 = vperm.slane %v512, 0
    %v1079 = vperm.slane %v512, 1
    %v1080 = vperm.slane %v512, 2
    %v1081 = vperm.slane %v512, 3
    %v1082 = vperm.slane %v512, 4
    %v1088 = vadd.f32 %v1072, %v1078
    %v1089 = vadd.f32 %v1073, %v1079
    %v1090 = vadd.f32 %v1074, %v1080
    %v1091 = vadd.f32 %v1075, %v1081
    %v1092 = vadd.f32 %v1076, %v1082
    %vm1093 = vcmp.ge.f32.partialorder %v1088, 0.0
    %vm1094 = vcmp.ge.f32.partialorder %v1089, 0.0
    %vm1095 = vcmp.ge.f32.partialorder %v1090, 0.0
    %vm1096 = vcmp.ge.f32.partialorder %v1091, 0.0
    %vm1097 = vcmp.ge.f32.partialorder %v1092, 0.0
    %v1098 = vmul.f32 %v1088, 0.01
    %v1099 = vmul.f32 %v1089, 0.01
    %v1100 = vmul.f32 %v1090, 0.01
    %v1101 = vmul.f32 %v1091, 0.01
    %v1102 = vmul.f32 %v1092, 0.01
    %v1103 = vsel %vm1093, %v1088, %v1098
    %v1104 = vsel %vm1094, %v1089, %v1099
    %v1105 = vsel %vm1095, %v1090, %v1100
    %v1106 = vsel %vm1096, %v1091, %v1101
    %v1107 = vsel %vm1097, %v1092, %v1102
    %v1108 = vpack.c.bf16 %v1103, %v1103
    %v1109 = vpack.c.bf16 %v1104, %v1104
    %v1110 = vpack.c.bf16 %v1105, %v1105
    %v1111 = vpack.c.bf16 %v1106, %v1106
    %v1112 = vpack.c.bf16 %v1107, %v1107
    %v1183 = vunpack.c.l.b16 %v74
    %v1184 = vunpack.c.l.b16 %v75
    %v1185 = vunpack.c.l.b16 %v76
    %v1186 = vunpack.c.l.b16 %v77
    %v1187 = vunpack.c.l.b16 %v78
    %v1188 = vunpack.c.l.b16 %v79
    %v1189 = vunpack.c.l.b16 %v80
    %v1190 = vunpack.c.l.b16 %v81
    %v1191 = vunpack.c.l.b16 %v82
    %v1192 = vunpack.c.l.b16 %v83
    %v1193 = vunpack.c.l.b16 %v84
    %v1194 = vunpack.c.l.b16 %v85
    %v1195 = vunpack.c.l.b16 %v86
    %v1196 = vunpack.c.l.b16 %v87
    %v1197 = vunpack.c.l.b16 %v88
    %v1198 = vunpack.c.l.b16 %v89
    %v1199 = vunpack.c.l.b16 %v90
    %v1200 = vunpack.c.l.b16 %v91
    %v1201 = vunpack.c.l.b16 %v92
    %v1202 = vunpack.c.l.b16 %v93
    %v1203 = vunpack.c.l.b16 %v94
    %v1204 = vunpack.c.l.b16 %v95
    %v1205 = vunpack.c.l.b16 %v96
    %v1206 = vunpack.c.l.b16 %v97
    %v1207 = vunpack.c.l.b16 %v98
    %v1208 = vunpack.c.l.b16 %v99
    %v1209 = vunpack.c.l.b16 %v100
    %v1210 = vunpack.c.l.b16 %v101
    %v1211 = vunpack.c.l.b16 %v102
    %v1212 = vunpack.c.l.b16 %v103
    %v1213 = vunpack.c.l.b16 %v104
    %v1214 = vunpack.c.l.b16 %v105
    %v1215 = vunpack.c.l.b16 %v106
    %v1216 = vunpack.c.l.b16 %v107
    %v1217 = vunpack.c.l.b16 %v108
    %v1218 = vunpack.c.l.b16 %v109
    %v1219 = vunpack.c.l.b16 %v110
    %v1220 = vunpack.c.l.b16 %v111
    %v1221 = vunpack.c.l.b16 %v112
    %v1222 = vunpack.c.l.b16 %v113
    %v1223 = vunpack.c.l.b16 %v114
    %v1224 = vunpack.c.l.b16 %v115
    %v1225 = vunpack.c.l.b16 %v116
    %v1226 = vunpack.c.l.b16 %v117
    %v1227 = vunpack.c.l.b16 %v118
    %v1228 = vunpack.c.l.b16 %v119
    %v1229 = vunpack.c.l.b16 %v120
    %v1230 = vunpack.c.l.b16 %v121
    %v1231 = vunpack.c.l.b16 %v122
    %v1232 = vunpack.c.l.b16 %v123
    %v1233 = vunpack.c.l.b16 %v124
    %v1234 = vunpack.c.l.b16 %v125
    %v1235 = vunpack.c.l.b16 %v126
    %v1236 = vunpack.c.l.b16 %v127
    %v1237 = vunpack.c.l.b16 %v128
    %v1238 = vunpack.c.l.b16 %v129
    %v1239 = vunpack.c.l.b16 %v130
    %v1240 = vunpack.c.l.b16 %v131
    %v1241 = vunpack.c.l.b16 %v132
    %v1242 = vunpack.c.l.b16 %v133
    %v1243 = vunpack.c.l.b16 %v134
    %v1244 = vunpack.c.l.b16 %v135
    %v1245 = vunpack.c.l.b16 %v136
    %v1246 = vunpack.c.l.b16 %v137
    %v1247 = vunpack.c.l.b16 %v138
    %v1248 = vunpack.c.l.b16 %v139
    %v1249 = vunpack.c.l.b16 %v140
    %v1250 = vunpack.c.l.b16 %v141
    %v1251 = vunpack.c.l.b16 %v142
    %v1252 = vunpack.c.l.b16 %v143
    %v1253 = vpack.c.b16 %v1184, %v1183
    %v1254 = vpack.c.b16 %v1186, %v1185
    %v1255 = vpack.c.b16 %v1188, %v1187
    %v1256 = vpack.c.b16 %v1190, %v1189
    %v1257 = vpack.c.b16 %v1192, %v1191
    %v1258 = vpack.c.b16 %v1194, %v1193
    %v1259 = vpack.c.b16 %v1196, %v1195
    %v1260 = vpack.c.b16 %v1198, %v1197
    %v1261 = vpack.c.b16 %v1200, %v1199
    %v1262 = vpack.c.b16 %v1202, %v1201
    %v1263 = vpack.c.b16 %v1204, %v1203
    %v1264 = vpack.c.b16 %v1206, %v1205
    %v1265 = vpack.c.b16 %v1208, %v1207
    %v1266 = vpack.c.b16 %v1210, %v1209
    %v1267 = vpack.c.b16 %v1212, %v1211
    %v1268 = vpack.c.b16 %v1214, %v1213
    %v1269 = vpack.c.b16 %v1216, %v1215
    %v1270 = vpack.c.b16 %v1218, %v1217
    %v1271 = vpack.c.b16 %v1220, %v1219
    %v1272 = vpack.c.b16 %v1222, %v1221
    %v1273 = vpack.c.b16 %v1224, %v1223
    %v1274 = vpack.c.b16 %v1226, %v1225
    %v1275 = vpack.c.b16 %v1228, %v1227
    %v1276 = vpack.c.b16 %v1230, %v1229
    %v1277 = vpack.c.b16 %v1232, %v1231
    %v1278 = vpack.c.b16 %v1234, %v1233
    %v1279 = vpack.c.b16 %v1236, %v1235
    %v1280 = vpack.c.b16 %v1238, %v1237
    %v1281 = vpack.c.b16 %v1240, %v1239
    %v1282 = vpack.c.b16 %v1242, %v1241
    %v1283 = vpack.c.b16 %v1244, %v1243
    %v1284 = vpack.c.b16 %v1246, %v1245
    %v1285 = vpack.c.b16 %v1248, %v1247
    %v1286 = vpack.c.b16 %v1250, %v1249
    %v1287 = vpack.c.b16 %v1252, %v1251
    %v1324 = vsel %vm550, %v1112, 0
    %1326 = vmatpush.bf16.msra.mxu0 %v1260
    %1327 = vmatpush.bf16.msra.mxu0 %v1259
    %1328 = vmatpush.bf16.msra.mxu0 %v1258
    %1329 = vmatpush.bf16.msra.mxu0 %v1257
    %1330 = vmatpush.bf16.msra.mxu0 %v1256
    %1331 = vmatpush.bf16.msra.mxu0 %v1255
    %1332 = vmatpush.bf16.msra.mxu0 %v1254
    %1333 = vmatpush.bf16.msra.mxu0 %v1253
    %1334 = vmatmul.bf16.gmra.mxu0 %v1108
    %v1335 = vpop.f32.mrf.mxu0
    %v1336 = vadd.f32 0.0, %v1335
    %v1337 = vpop.f32.mrf.mxu0
    %1338 = vdwg.mxu0
    %1339 = vmatpush.bf16.msra.mxu0 %v1268
    %1340 = vmatpush.bf16.msra.mxu0 %v1267
    %1341 = vmatpush.bf16.msra.mxu0 %v1266
    %1342 = vmatpush.bf16.msra.mxu0 %v1265
    %1343 = vmatpush.bf16.msra.mxu0 %v1264
    %1344 = vmatpush.bf16.msra.mxu0 %v1263
    %1345 = vmatpush.bf16.msra.mxu0 %v1262
    %1346 = vmatpush.bf16.msra.mxu0 %v1261
    %1347 = vmatmul.bf16.gmra.mxu0 %v1109
    %v1348 = vpop.f32.mrf.mxu0
    %v1349 = vadd.f32 %v1336, %v1348
    %v1350 = vpop.f32.mrf.mxu0
    %1351 = vdwg.mxu0
    %1352 = vmatpush.bf16.msra.mxu0 %v1276
    %1353 = vmatpush.bf16.msra.mxu0 %v1275
    %1354 = vmatpush.bf16.msra.mxu0 %v1274
    %1355 = vmatpush.bf16.msra.mxu0 %v1273
    %1356 = vmatpush.bf16.msra.mxu0 %v1272
    %1357 = vmatpush.bf16.msra.mxu0 %v1271
    %1358 = vmatpush.bf16.msra.mxu0 %v1270
    %1359 = vmatpush.bf16.msra.mxu0 %v1269
    %1360 = vmatmul.bf16.gmra.mxu0 %v1110
    %v1361 = vpop.f32.mrf.mxu0
    %v1362 = vadd.f32 %v1349, %v1361
    %v1363 = vpop.f32.mrf.mxu0
    %1364 = vdwg.mxu0
    %1365 = vmatpush.bf16.msra.mxu0 %v1284
    %1366 = vmatpush.bf16.msra.mxu0 %v1283
    %1367 = vmatpush.bf16.msra.mxu0 %v1282
    %1368 = vmatpush.bf16.msra.mxu0 %v1281
    %1369 = vmatpush.bf16.msra.mxu0 %v1280
    %1370 = vmatpush.bf16.msra.mxu0 %v1279
    %1371 = vmatpush.bf16.msra.mxu0 %v1278
    %1372 = vmatpush.bf16.msra.mxu0 %v1277
    %1373 = vmatmul.bf16.gmra.mxu0 %v1111
    %v1374 = vpop.f32.mrf.mxu0
    %v1375 = vadd.f32 %v1362, %v1374
    %v1376 = vpop.f32.mrf.mxu0
    %1377 = vdwg.mxu0
    %1378 = vmatpush.bf16.msra.mxu0 0
    %1379 = vmatpush.bf16.msra.mxu0 0
    %1380 = vmatpush.bf16.msra.mxu0 0
    %1381 = vmatpush.bf16.msra.mxu0 0
    %1382 = vmatpush.bf16.msra.mxu0 0
    %1383 = vmatpush.bf16.msra.mxu0 %v1287
    %1384 = vmatpush.bf16.msra.mxu0 %v1286
    %1385 = vmatpush.bf16.msra.mxu0 %v1285
    %1386 = vmatmul.bf16.gmra.mxu0 %v1324
    %v1387 = vpop.f32.mrf.mxu0
    %v1388 = vadd.f32 %v1375, %v1387
    %v1389 = vpop.f32.mrf.mxu0
    %1390 = vdwg.mxu0
    %v1391 = vld [vmem:[%s4 + $0x2] ss:$0 sm:$0xff]
    %v1392 = vld [vmem:[%s4 + $0x3] ss:$0 sm:$0xff]
    %vm1393 = vcmask 814080
    %v1394 = vsel %vm1393, %v1388, 0.0
    %v1395 = vrot.slane %v1394, 4
    %v1396 = vadd.f32 %v1394, %v1395
    %v1397 = vrot.slane %v1396, 2
    %v1398 = vadd.f32 %v1396, %v1397
    %v1399 = vrot.slane %v1398, 1
    %v1400 = vadd.f32 %v1398, %v1399
    %vm1401 = vcmask 818176
    %v1403 = vsel %vm1401, %v1400, 0
    %v1406 = vsel %vm513, %v309, 0
    %1408 = vmatpush.msra.mxu0 0.0
    %1409 = vmatpush.msra.mxu0 0.0
    %1410 = vmatpush.msra.mxu0 0.0
    %1411 = vmatpush.msra.mxu0 %v1406
    %1412 = vmatpush.msra.mxu0 %v308
    %1413 = vmatpush.msra.mxu0 %v307
    %1414 = vmatpush.msra.mxu0 %v306
    %1415 = vmatpush.msra.mxu0 %v305
    %1416 = vmatpush.msra.mxu0 %v304
    %1417 = vmatpush.msra.mxu0 %v303
    %1418 = vmatpush.msra.mxu0 %v302
    %1419 = vmatpush.msra.mxu0 %v301
    %1420 = vmatpush.msra.mxu0 %v300
    %1421 = vmatpush.msra.mxu0 %v299
    %1422 = vmatpush.msra.mxu0 %v298
    %1423 = vmatpush.msra.mxu0 %v297
    %1424 = vmatmul.f32.gmra.mxu0 %v1403
    %v1425 = vpop.f32.mrf.mxu0
    %v1426 = vadd.f32 0.0, %v1425
    %1427 = vdwg.mxu0
    %v1428 = vmul.f32 %v1426, 0.025
    %vm1429 = vcmask 80896
    %v1431 = vsel %vm1429, %v1428, 0
    %v1434 = vsel %vm1053, %v73, 0
    %1436 = vmatpush.msra.mxu0 0.0
    %1437 = vmatpush.msra.mxu0 0.0
    %1438 = vmatpush.msra.mxu0 0.0
    %1439 = vmatpush.msra.mxu0 0.0
    %1440 = vmatpush.msra.mxu0 0.0
    %1441 = vmatpush.msra.mxu0 0.0
    %1442 = vmatpush.msra.mxu0 0.0
    %1443 = vmatpush.msra.mxu0 0.0
    %1444 = vmatpush.msra.mxu0 0.0
    %1445 = vmatpush.msra.mxu0 0.0
    %1446 = vmatpush.msra.mxu0 0.0
    %1447 = vmatpush.msra.mxu0 0.0
    %1448 = vmatpush.msra.mxu0 0.0
    %1449 = vmatpush.msra.mxu0 0.0
    %1450 = vmatpush.msra.mxu0 %v1434
    %1451 = vmatpush.msra.mxu0 %v72
    %1452 = vmatmul.f32.gmra.mxu0 %v1431
    %v1453 = vpop.f32.mrf.mxu0
    %v1454 = vadd.f32 0.0, %v1453
    %1455 = vdwg.mxu0
    %v1456 = vperm.slane %v1454, 0
    %v1457 = vsub.f32 %v1388, %v1456
    %v1458 = vmul.f32 %v1457, %v1457
    %v1459 = vsel %vm1393, %v1458, 0.0
    %v1460 = vrot.slane %v1459, 4
    %v1461 = vadd.f32 %v1459, %v1460
    %v1462 = vrot.slane %v1461, 2
    %v1463 = vadd.f32 %v1461, %v1462
    %v1464 = vrot.slane %v1463, 1
    %v1465 = vadd.f32 %v1463, %v1464
    %v1467 = vsel %vm1401, %v1465, 0
    %1469 = vmatpush.msra.mxu0 0.0
    %1470 = vmatpush.msra.mxu0 0.0
    %1471 = vmatpush.msra.mxu0 0.0
    %1472 = vmatpush.msra.mxu0 %v1406
    %1473 = vmatpush.msra.mxu0 %v308
    %1474 = vmatpush.msra.mxu0 %v307
    %1475 = vmatpush.msra.mxu0 %v306
    %1476 = vmatpush.msra.mxu0 %v305
    %1477 = vmatpush.msra.mxu0 %v304
    %1478 = vmatpush.msra.mxu0 %v303
    %1479 = vmatpush.msra.mxu0 %v302
    %1480 = vmatpush.msra.mxu0 %v301
    %1481 = vmatpush.msra.mxu0 %v300
    %1482 = vmatpush.msra.mxu0 %v299
    %1483 = vmatpush.msra.mxu0 %v298
    %1484 = vmatpush.msra.mxu0 %v297
    %1485 = vmatmul.f32.gmra.mxu0 %v1467
    %v1486 = vpop.f32.mrf.mxu0
    %v1487 = vadd.f32 0.0, %v1486
    %1488 = vdwg.mxu0
    %v1489 = vmul.f32 %v1487, 0.025
    %v1490 = vadd.f32 %v1489, 1e-05
    %v1491 = vrsqrt.pop %v1490
    %v1492 = vmul.f32 %v1491, %v1490
    %v1493 = vmul.f32 %v1492, %v1491
    %v1494 = vmul.f32 0.5, %v1493
    %v1495 = vsub.f32 1.5, %v1494
    %v1496 = vmul.f32 %v1491, %v1495
    %vm1497 = vweird.f32 %v1490
    %vm1498 = vweird.f32 %v1491
    %vm1499 = vmor %vm1497, %vm1498
    %v1500 = vsel %vm1499, %v1491, %v1496
    %v1502 = vsel %vm1429, %v1500, 0
    %1504 = vmatpush.msra.mxu0 0.0
    %1505 = vmatpush.msra.mxu0 0.0
    %1506 = vmatpush.msra.mxu0 0.0
    %1507 = vmatpush.msra.mxu0 0.0
    %1508 = vmatpush.msra.mxu0 0.0
    %1509 = vmatpush.msra.mxu0 0.0
    %1510 = vmatpush.msra.mxu0 0.0
    %1511 = vmatpush.msra.mxu0 0.0
    %1512 = vmatpush.msra.mxu0 0.0
    %1513 = vmatpush.msra.mxu0 0.0
    %1514 = vmatpush.msra.mxu0 0.0
    %1515 = vmatpush.msra.mxu0 0.0
    %1516 = vmatpush.msra.mxu0 0.0
    %1517 = vmatpush.msra.mxu0 0.0
    %1518 = vmatpush.msra.mxu0 %v1434
    %1519 = vmatpush.msra.mxu0 %v72
    %1520 = vmatmul.f32.gmra.mxu0 %v1502
    %v1521 = vpop.f32.mrf.mxu0
    %v1522 = vadd.f32 0.0, %v1521
    %1523 = vdwg.mxu0
    %v1524 = vmul.f32 %v1391, %v1522
    %v1525 = vperm.slane %v1524, 0
    %v1526 = vmul.f32 %v1457, %v1525
    %v1527 = vadd.f32 %v1526, %v1392
    %vm1528 = vcmp.ge.f32.partialorder %v1527, 0.0
    %v1529 = vmul.f32 %v1527, 0.01
    %v1530 = vsel %vm1528, %v1527, %v1529
    %v1531 = vpack.c.bf16 %v1530, %v1530
    %v1545 = vunpack.c.l.b16 %v310
    %v1546 = vunpack.c.l.b16 %v311
    %v1547 = vunpack.c.l.b16 %v312
    %v1548 = vunpack.c.l.b16 %v313
    %v1549 = vunpack.c.l.b16 %v314
    %v1550 = vunpack.c.l.b16 %v315
    %v1551 = vunpack.c.l.b16 %v316
    %v1552 = vunpack.c.l.b16 %v317
    %v1553 = vunpack.c.l.b16 %v318
    %v1554 = vunpack.c.l.b16 %v319
    %v1555 = vunpack.c.l.b16 %v320
    %v1556 = vunpack.c.l.b16 %v321
    %v1557 = vunpack.c.l.b16 %v322
    %v1558 = vpack.c.b16 %v1546, %v1545
    %v1559 = vpack.c.b16 %v1548, %v1547
    %v1560 = vpack.c.b16 %v1550, %v1549
    %v1561 = vpack.c.b16 %v1552, %v1551
    %v1562 = vpack.c.b16 %v1554, %v1553
    %v1563 = vpack.c.b16 %v1556, %v1555
    %v1564 = vpack.c.b16 %v1557, %v1557
    %v1572 = vsel %vm1401, %v1531, 0
    %v1575 = vsel %vm1053, %v1564, 0
    %1577 = vmatpush.bf16.msra.mxu0 0
    %1578 = vmatpush.bf16.msra.mxu0 %v1575
    %1579 = vmatpush.bf16.msra.mxu0 %v1563
    %1580 = vmatpush.bf16.msra.mxu0 %v1562
    %1581 = vmatpush.bf16.msra.mxu0 %v1561
    %1582 = vmatpush.bf16.msra.mxu0 %v1560
    %1583 = vmatpush.bf16.msra.mxu0 %v1559
    %1584 = vmatpush.bf16.msra.mxu0 %v1558
    %1585 = vmatmul.bf16.gmra.mxu0 %v1572
    %v1586 = vpop.f32.mrf.mxu0
    %v1587 = vadd.f32 0.0, %v1586
    %v1588 = vpop.f32.mrf.mxu0
    %1589 = vdwg.mxu0
    %v1590 = vld [vmem:[%s4 + $0x4] ss:$0 sm:$0xff]
    %v1591 = vld [vmem:[%s4 + $0x5] ss:$0 sm:$0xff]
    %vm1592 = vcmask 486400
    %v1593 = vsel %vm1592, %v1587, 0.0
    %v1594 = vrot.slane %v1593, 4
    %v1595 = vadd.f32 %v1593, %v1594
    %v1596 = vrot.slane %v1595, 2
    %v1597 = vadd.f32 %v1595, %v1596
    %v1598 = vrot.slane %v1597, 1
    %v1599 = vadd.f32 %v1597, %v1598
    %v1600 = vrcp.pop 4.0
    %v1601 = vmul.f32 4.0, %v1600
    %v1602 = vsub.f32 1.0, %v1601
    %v1603 = vmul.f32 %v1600, %v1602
    %v1604 = vadd.f32 %v1600, %v1603
    %vm1605 = vweird.f32 %v1600
    %v1606 = vsel %vm1605, %v1600, %v1604
    %v1607 = vmul.f32 %v1599, %v1606
    %v1608 = vsub.f32 %v1587, %v1607
    %v1609 = vmul.f32 %v1608, %v1608
    %v1610 = vsel %vm1592, %v1609, 0.0
    %v1611 = vrot.slane %v1610, 4
    %v1612 = vadd.f32 %v1610, %v1611
    %v1613 = vrot.slane %v1612, 2
    %v1614 = vadd.f32 %v1612, %v1613
    %v1615 = vrot.slane %v1614, 1
    %v1616 = vadd.f32 %v1614, %v1615
    %v1617 = vmul.f32 %v1616, %v1606
    %v1618 = vadd.f32 %v1617, 1e-05
    %v1619 = vrsqrt.pop %v1618
    %v1620 = vmul.f32 %v1619, %v1618
    %v1621 = vmul.f32 %v1620, %v1619
    %v1622 = vmul.f32 0.5, %v1621
    %v1623 = vsub.f32 1.5, %v1622
    %v1624 = vmul.f32 %v1619, %v1623
    %vm1625 = vweird.f32 %v1618
    %vm1626 = vweird.f32 %v1619
    %vm1627 = vmor %vm1625, %vm1626
    %v1628 = vsel %vm1627, %v1619, %v1624
    %v1629 = vmul.f32 %v1590, %v1628
    %v1630 = vmul.f32 %v1608, %v1629
    %v1631 = vadd.f32 %v1630, %v1591
    %vm1632 = vcmp.ge.f32.partialorder %v1631, 0.0
    %v1633 = vmul.f32 %v1631, 0.01
    %v1634 = vsel %vm1632, %v1631, %v1633
    %v1635 = vpack.c.bf16 %v1634, %v1634
    %v1644 = vunpack.c.l.b16 %v323
    %v1645 = vunpack.c.l.b16 %v324
    %v1646 = vunpack.c.l.b16 %v325
    %v1647 = vunpack.c.l.b16 %v326
    %v1648 = vunpack.c.l.b16 %v327
    %v1649 = vunpack.c.l.b16 %v328
    %v1650 = vunpack.c.l.b16 %v329
    %v1651 = vunpack.c.l.b16 %v330
    %v1652 = vpack.c.b16 %v1645, %v1644
    %v1653 = vpack.c.b16 %v1647, %v1646
    %v1654 = vpack.c.b16 %v1649, %v1648
    %v1655 = vpack.c.b16 %v1651, %v1650
    %vm1659 = vcmask 490496
    %v1661 = vsel %vm1659, %v1635, 0
    %vm1663 = vcmask 1045504
    %v1665 = vsel %vm1663, %v1655, 0
    %1667 = vmatpush.bf16.msra.mxu0 0
    %1668 = vmatpush.bf16.msra.mxu0 0
    %1669 = vmatpush.bf16.msra.mxu0 0
    %1670 = vmatpush.bf16.msra.mxu0 0
    %1671 = vmatpush.bf16.msra.mxu0 %v1665
    %1672 = vmatpush.bf16.msra.mxu0 %v1654
    %1673 = vmatpush.bf16.msra.mxu0 %v1653
    %1674 = vmatpush.bf16.msra.mxu0 %v1652
    %1675 = vmatmul.bf16.gmra.mxu0 %v1661
    %v1676 = vpop.f32.mrf.mxu0
    %v1677 = vadd.f32 0.0, %v1676
    %v1678 = vpop.f32.mrf.mxu0
    %1679 = vdwg.mxu0
    %v1680 = vld [vmem:[%s4 + $0x6] ss:$0 sm:$0xff]
    %v1681 = vld [vmem:[%s4 + $0x7] ss:$0 sm:$0xff]
    %vm1682 = vcmask 19456
    %v1683 = vsel %vm1682, %v1677, 0.0
    %v1684 = vrot.slane %v1683, 4
    %v1685 = vadd.f32 %v1683, %v1684
    %v1686 = vrot.slane %v1685, 2
    %v1687 = vadd.f32 %v1685, %v1686
    %v1688 = vrot.slane %v1687, 1
    %v1689 = vadd.f32 %v1687, %v1688
    %v1690 = vmul.f32 %v1689, %v1606
    %v1691 = vsub.f32 %v1677, %v1690
    %v1692 = vmul.f32 %v1691, %v1691
    %v1693 = vsel %vm1682, %v1692, 0.0
    %v1694 = vrot.slane %v1693, 4
    %v1695 = vadd.f32 %v1693, %v1694
    %v1696 = vrot.slane %v1695, 2
    %v1697 = vadd.f32 %v1695, %v1696
    %v1698 = vrot.slane %v1697, 1
    %v1699 = vadd.f32 %v1697, %v1698
    %v1700 = vmul.f32 %v1699, %v1606
    %v1701 = vadd.f32 %v1700, 1e-05
    %v1702 = vrsqrt.pop %v1701
    %v1703 = vmul.f32 %v1702, %v1701
    %v1704 = vmul.f32 %v1703, %v1702
    %v1705 = vmul.f32 0.5, %v1704
    %v1706 = vsub.f32 1.5, %v1705
    %v1707 = vmul.f32 %v1702, %v1706
    %vm1708 = vweird.f32 %v1701
    %vm1709 = vweird.f32 %v1702
    %vm1710 = vmor %vm1708, %vm1709
    %v1711 = vsel %vm1710, %v1702, %v1707
    %v1712 = vmul.f32 %v1680, %v1711
    %v1713 = vmul.f32 %v1691, %v1712
    %v1714 = vadd.f32 %v1713, %v1681
    %1715 = vst.msk [vmem:[#allocation2] sm:$0xf] %vm1682, %v1714
    // Predicated region
    $region22: #{truncated_cnn_forward.1} parent=1 // pred_check
      _
    $region23: #{truncated_cnn_forward.1} parent=1 // pred_check_branch
      %1717 = sbr.rel (0) target = $region25
    $region24: #{truncated_cnn_forward.1} parent=1 // pred_region
      %1719 = vsyncadd [#allocation3], 0
      %s1721 = sshll.u32 [#allocation2], 4
      %s1722 = int_to_ptr.vmem [resolvable:$true] %s1721
      %s1723 = sshll.u32 %s5, 4
      %s1724 = int_to_ptr.hbm [resolvable:$true] %s1723
      %1726 = dma.vmem_to_hbm [thread:$0]  %s1722, 64, %s1724, [#allocation3]
    $region25: #{truncated_cnn_forward.1} parent=1 // pred_fallthru
      _
    // Predicated region
    $region26: #{truncated_cnn_forward.1} parent=1 // pred_check
      _
    $region27: #{truncated_cnn_forward.1} parent=1 // pred_check_branch
      %1728 = sbr.rel (0) target = $region29
    $region28: #{truncated_cnn_forward.1} parent=1 // pred_region
      %1730 = dma.done [#allocation3], 64
    $region29: #{truncated_cnn_forward.1} parent=1 // pred_fallthru
      _
    %1731 = vsyncpa [#allocation3], 1

</llo_original>
